<compile_context>
chip_gen: v6e
topology: v6e:2x2x1
jax: 0.10.0
libtpu: 0.0.40
codegen_flags: <defaults>
</compile_context>

<pallas_src>
import functools

import jax
import jax.numpy as jnp
import numpy as np
from jax.experimental import pallas as pl
from jax.experimental.pallas import tpu as pltpu


# --------------------------------------------------------------------------- kernels
def _svd_stream_kernel(rate_min, rate_max, eu_ref, ev_ref, bias_ref, out_ref):
    # eu_ref, ev_ref : (D, TB)   gathered embeddings, batch on the lane axis,
    #                            streamed in the tables' native dtype
    # bias_ref       : (1,1,TB)  bias_u + bias_v + rate_mean (f32, lane-dense)
    # out_ref        : (1,1,TB)  lane-dense f32 output block
    prod = eu_ref[...].astype(jnp.float32) * ev_ref[...].astype(jnp.float32)   # VPU
    dot = jnp.sum(prod, axis=0, keepdims=True)             # (1, TB) sublane reduce
    pred = jnp.clip(dot + bias_ref[...].reshape(dot.shape), rate_min, rate_max)
    out_ref[...] = pred.reshape(out_ref.shape)


def _svd_resident_kernel(rate_min, rate_max,
                         ut_ref, vt_ref, uidx_ref, vidx_ref, bias_ref, out_ref):
    # ut_ref, vt_ref : (D, Nu) / (D, Ni)  whole tables resident in VMEM (native dtype)
    # uidx_ref       : (1,1,TB) int32 user indices for this tile
    # vidx_ref       : (1,1,TB) int32 item indices for this tile
    # bias_ref       : (1,1,TB) f32  bias_u + bias_v + rate_mean
    # out_ref        : (1,1,TB) f32
    tdt = ut_ref.dtype
    nu = ut_ref.shape[1]
    ni = vt_ref.shape[1]
    tb = out_ref.shape[-1]
    uidx = uidx_ref[...].reshape(1, tb)
    vidx = vidx_ref[...].reshape(1, tb)
    # In-kernel gather as a one-hot MXU matmul (exact: rows are selected by 0/1).
    uoh = (jax.lax.broadcasted_iota(jnp.int32, (nu, tb), 0) == uidx).astype(tdt)
    voh = (jax.lax.broadcasted_iota(jnp.int32, (ni, tb), 0) == vidx).astype(tdt)
    eu = jnp.dot(ut_ref[...], uoh, preferred_element_type=jnp.float32)   # (D, TB)
    ev = jnp.dot(vt_ref[...], voh, preferred_element_type=jnp.float32)   # (D, TB)
    dot = jnp.sum(eu * ev, axis=0, keepdims=True)                        # (1, TB)
    pred = jnp.clip(dot + bias_ref[...].reshape(dot.shape), rate_min, rate_max)
    out_ref[...] = pred.reshape(out_ref.shape)


# --------------------------------------------------------------------------- wrapper
def _tile_size(batch, cap):
    """Largest power-of-two tile in [128, cap] that still leaves >= 2 grid steps
    whenever the batch allows it (v7x has 2 TensorCores; batch axis is "parallel")."""
    tb = 128
    while tb * 2 <= cap and tb * 2 < batch:
        tb *= 2
    return tb


def svd_forward(user, item, embed_user, embed_item, bias_user, bias_item, *,
                rate_mean=0.0, rate_min=0.0, rate_max=5.0,
                gather="auto", min_pallas_batch=1024):
    """SVD forward. Returns (B,) float32 predictions.

    gather: "auto" (choose), "resident" (in-kernel one-hot gather, tables in VMEM),
            or "stream" (XLA gather outside, lane-dense streams into the kernel).
    """
    B = user.shape[0]
    Nu, D = embed_user.shape
    Ni = embed_item.shape[0]
    user = user.astype(jnp.int32)
    item = item.astype(jnp.int32)
    rate_mean = float(rate_mean)
    rate_min = float(rate_min)
    rate_max = float(rate_max)

    # Small-batch fast path: below ~1-2 tiles, padding + launch overhead dominate
    # and XLA's fused gather+reduce wins.
    if gather == "auto" and B < min_pallas_batch:
        eu = jnp.take(embed_user, user, axis=0).astype(jnp.float32)
        ev = jnp.take(embed_item, item, axis=0).astype(jnp.float32)
        bu = jnp.take(bias_user[:, 0], user, axis=0).astype(jnp.float32)
        bv = jnp.take(bias_item[:, 0], item, axis=0).astype(jnp.float32)
        pred = jnp.sum(eu * ev, axis=1) + bu + bv + rate_mean
        return jnp.clip(pred, rate_min, rate_max)

    esize = jnp.dtype(embed_user.dtype).itemsize
    table_bytes = (Nu + Ni) * D * esize
    if gather == "auto":
        # Table-resident in-kernel gather pays off while both tables fit comfortably
        # in VMEM on every generation (conservative: v7x has only 64 MiB physical)
        # and the one-hot matmul flops stay below the streamed-bytes cost.
        use_resident = (max(Nu, Ni) <= 1024) and (table_bytes <= 4 * 1024 * 1024)
    else:
        use_resident = (gather == "resident")

    # Tile-size cap from VMEM budgets (conservative for the 64 MiB v7x generation).
    if use_resident:
        # Keep each (N, TB) one-hot transient under ~4 MiB.
        oh_cap = max(128, ((4 * 1024 * 1024) // (4 * max(Nu, Ni))) // 128 * 128)
        cap = min(8192, oh_cap)
    else:
        # Two double-buffered (D, TB) native-dtype streams under ~8 MiB total.
        vm_cap = max(128, ((8 * 1024 * 1024) // (4 * D * esize)) // 128 * 128)
        cap = min(8192, vm_cap)

    TB = _tile_size(B, cap)
    nt = pl.cdiv(B, TB)
    Bp = nt * TB
    pad = Bp - B

    user_p = jnp.pad(user, (0, pad)) if pad else user   # pad with valid index 0
    item_p = jnp.pad(item, (0, pad)) if pad else item

    # Single fused bias stream (bias_u + bias_v + rate_mean), lane-dense.
    bias = (jnp.take(bias_user[:, 0], user_p, axis=0).astype(jnp.float32)
            + jnp.take(bias_item[:, 0], item_p, axis=0).astype(jnp.float32)
            + jnp.float32(rate_mean))
    bias = bias.reshape(nt, 1, TB)

    out_shape = jax.ShapeDtypeStruct((nt, 1, TB), jnp.float32)
    lane_spec = pl.BlockSpec((1, 1, TB), lambda i: (i, 0, 0))   # lane-dense 1D blocks

    if use_resident:
        kernel = functools.partial(_svd_resident_kernel, rate_min, rate_max)
        uidx = user_p.reshape(nt, 1, TB)
        vidx = item_p.reshape(nt, 1, TB)
        ut = embed_user.T        # (D, Nu), small; whole table resident in VMEM
        vt = embed_item.T        # (D, Ni)
        flops = 2 * D * (Nu + Ni) * Bp + 3 * Bp
        bytes_accessed = table_bytes + (4 + 4 + 4 + 4) * Bp
        out = pl.pallas_call(
            kernel,
            grid=(nt,),
            in_specs=[
                pl.BlockSpec(memory_space=pltpu.MemorySpace.VMEM),   # user table, whole
                pl.BlockSpec(memory_space=pltpu.MemorySpace.VMEM),   # item table, whole
                lane_spec,                                           # user indices
                lane_spec,                                           # item indices
                lane_spec,                                           # fused bias
            ],
            out_specs=lane_spec,
            out_shape=out_shape,
            compiler_params=pltpu.CompilerParams(
                dimension_semantics=("parallel",),          # shard batch on v7x 2-TC
                vmem_limit_bytes=32 * 1024 * 1024),
            cost_estimate=pl.CostEstimate(flops=flops, transcendentals=0,
                                          bytes_accessed=bytes_accessed),
        )(ut, vt, uidx, vidx, bias)
    else:
        # Streaming fallback for large tables: gather outside the kernel, but present
        # the streams with the batch on the lane axis ((D, Bp) -> (D, TB) blocks) and
        # in the tables' native dtype (cast to f32 inside the kernel).
        # TODO(synk): for very large tables this still materializes (D, Bp) in HBM once;
        # fusing the gather into the Pallas input pipeline (CompilerParams.allow_input_fusion)
        # is left out to keep the lowering path simple and portable.
        kernel = functools.partial(_svd_stream_kernel, rate_min, rate_max)
        eu = jnp.take(embed_user, user_p, axis=0).T        # (D, Bp)
        ev = jnp.take(embed_item, item_p, axis=0).T        # (D, Bp)
        flops = 2 * D * Bp + 3 * Bp
        bytes_accessed = 2 * D * esize * Bp + 4 * Bp + 4 * Bp
        out = pl.pallas_call(
            kernel,
            grid=(nt,),
            in_specs=[
                pl.BlockSpec((D, TB), lambda i: (0, i)),   # user embeddings (lane=batch)
                pl.BlockSpec((D, TB), lambda i: (0, i)),   # item embeddings (lane=batch)
                lane_spec,                                 # fused bias
            ],
            out_specs=lane_spec,
            out_shape=out_shape,
            compiler_params=pltpu.CompilerParams(
                dimension_semantics=("parallel",),
                vmem_limit_bytes=32 * 1024 * 1024),
            cost_estimate=pl.CostEstimate(flops=flops, transcendentals=0,
                                          bytes_accessed=bytes_accessed),
        )(eu, ev, bias)

    return out.reshape(Bp)[:B]   # torch .squeeze()


# --------------------------------------------------------------------------- reference
def _reference(user, item, embed_user, embed_item, bias_user, bias_item,
               rate_mean, rate_min, rate_max):
    eu = embed_user[user]
    ev = embed_item[item]
    bu = bias_user[user]
    bv = bias_item[item]
    pred = jnp.sum(eu * ev, axis=1, keepdims=True) + bu + bv + rate_mean
    return jnp.clip(pred, rate_min, rate_max)[:, 0]


if __name__ == "__main__":
    num_users, num_items, embed_dim = 64, 64, 32
    rate_mean, rate_min, rate_max = 3.0, 1.0, 5.0

    key = jax.random.PRNGKey(0)
    k_u, k_i, k_b = jax.random.split(key, 3)

    # Deterministic init (xavier_uniform for embeddings). The torch constructor zeroes
    # the biases; use non-zero values here so the bias path (and clamping) is exercised.
    bound_u = float(np.sqrt(6.0 / (num_users + embed_dim)))
    bound_i = float(np.sqrt(6.0 / (num_items + embed_dim)))
    embed_user_w = jax.random.uniform(k_u, (num_users, embed_dim),
                                      minval=-bound_u, maxval=bound_u, dtype=jnp.float32)
    embed_item_w = jax.random.uniform(k_i, (num_items, embed_dim),
                                      minval=-bound_i, maxval=bound_i, dtype=jnp.float32)
    k_bu, k_bi = jax.random.split(k_b)
    bias_user_w = 1.0 * jax.random.normal(k_bu, (num_users, 1), dtype=jnp.float32)
    bias_item_w = 1.0 * jax.random.normal(k_bi, (num_items, 1), dtype=jnp.float32)

    cases = [
        (8, 1, "auto"),        # small-batch fast path (pure fused JAX, no kernel)
        (1500, 2, "auto"),     # Pallas, table-resident one-hot gather, tail padding
        (1300, 3, "stream"),   # Pallas, streaming path, tail padding
        (2048, 4, "stream"),   # Pallas, streaming path, exact tile multiple (nt=2)
    ]
    for batch, seed, mode in cases:
        kk = jax.random.PRNGKey(seed)
        k1, k2 = jax.random.split(kk)
        user = jax.random.randint(k1, (batch,), 0, num_users, dtype=jnp.int32)
        item = jax.random.randint(k2, (batch,), 0, num_items, dtype=jnp.int32)

        out = svd_forward(user, item, embed_user_w, embed_item_w,
                          bias_user_w, bias_item_w,
                          rate_mean=rate_mean, rate_min=rate_min, rate_max=rate_max,
                          gather=mode)
        out = jax.block_until_ready(out)

        ref = _reference(user, item, embed_user_w, embed_item_w,
                         bias_user_w, bias_item_w, rate_mean, rate_min, rate_max)
        assert out.shape == (batch,)
        np.testing.assert_allclose(np.asarray(out), np.asarray(ref),
                                   rtol=1e-5, atol=1e-5)

    print("KERNEL_OK")
</pallas_src>

<mosaic_0001>
module attributes {stable_mosaic.version = 11 : i64} {
  func.func @_svd_resident_kernel(%arg0: i32, %arg1: memref<32x64xf32, #tpu.memory_space<vmem>>, %arg2: memref<32x64xf32, #tpu.memory_space<vmem>>, %arg3: memref<1x1x1024xi32, #tpu.memory_space<vmem>>, %arg4: memref<1x1x1024xi32, #tpu.memory_space<vmem>>, %arg5: memref<1x1x1024xf32, #tpu.memory_space<vmem>>, %arg6: memref<1x1x1024xf32, #tpu.memory_space<vmem>>) attributes {dimension_semantics = [#tpu.dimension_semantics<parallel>], iteration_bounds = array<i64: 2>, scalar_prefetch = 0 : i64, scratch_operands = 0 : i64, tpu.core_type = #tpu.core_type<tc>, window_params = [{pipeline_mode = #tpu.pipeline_mode<synchronous>, transform_indices = @transform_0, window_bounds = array<i64: 32, 64>}, {pipeline_mode = #tpu.pipeline_mode<synchronous>, transform_indices = @transform_1, window_bounds = array<i64: 32, 64>}, {transform_indices = @transform_2, window_bounds = array<i64: 1, 1, 1024>}, {transform_indices = @transform_3, window_bounds = array<i64: 1, 1, 1024>}, {transform_indices = @transform_4, window_bounds = array<i64: 1, 1, 1024>}, {transform_indices = @transform_5, window_bounds = array<i64: 1, 1, 1024>}]} {
    %c0 = arith.constant 0 : index
    %c0_0 = arith.constant 0 : index
    %c0_1 = arith.constant 0 : index
    %0 = vector.load %arg3[%c0, %c0_0, %c0_1] : memref<1x1x1024xi32, #tpu.memory_space<vmem>>, vector<1x1x1024xi32>
    %1 = vector.shape_cast %0 : vector<1x1x1024xi32> to vector<1x1024xi32>
    %c0_2 = arith.constant 0 : index
    %c0_3 = arith.constant 0 : index
    %c0_4 = arith.constant 0 : index
    %2 = vector.load %arg4[%c0_2, %c0_3, %c0_4] : memref<1x1x1024xi32, #tpu.memory_space<vmem>>, vector<1x1x1024xi32>
    %3 = vector.shape_cast %2 : vector<1x1x1024xi32> to vector<1x1024xi32>
    %4 = tpu.iota {dimensions = array<i32: 0>} : vector<64x1024xi32>
    %5 = vector.broadcast %1 : vector<1x1024xi32> to vector<64x1024xi32>
    %6 = arith.cmpi eq, %4, %5 : vector<64x1024xi32>
    %7 = arith.extui %6 : vector<64x1024xi1> to vector<64x1024xi32>
    %8 = arith.sitofp %7 : vector<64x1024xi32> to vector<64x1024xf32>
    %9 = tpu.iota {dimensions = array<i32: 0>} : vector<64x1024xi32>
    %10 = vector.broadcast %3 : vector<1x1024xi32> to vector<64x1024xi32>
    %11 = arith.cmpi eq, %9, %10 : vector<64x1024xi32>
    %12 = arith.extui %11 : vector<64x1024xi1> to vector<64x1024xi32>
    %13 = arith.sitofp %12 : vector<64x1024xi32> to vector<64x1024xf32>
    %c0_5 = arith.constant 0 : index
    %c0_6 = arith.constant 0 : index
    %14 = vector.load %arg1[%c0_5, %c0_6] : memref<32x64xf32, #tpu.memory_space<vmem>>, vector<32x64xf32>
    %cst = arith.constant dense<0.000000e+00> : vector<32x1024xf32>
    %15 = tpu.matmul %14, %8, %cst {dimension_numbers = #tpu.dot_dimension_numbers<[1], [0], [0], [1], [0, 0, 1, 1], [], []>} : vector<32x64xf32>, vector<64x1024xf32>, vector<32x1024xf32> -> vector<32x1024xf32>
    %c0_7 = arith.constant 0 : index
    %c0_8 = arith.constant 0 : index
    %16 = vector.load %arg2[%c0_7, %c0_8] : memref<32x64xf32, #tpu.memory_space<vmem>>, vector<32x64xf32>
    %cst_9 = arith.constant dense<0.000000e+00> : vector<32x1024xf32>
    %17 = tpu.matmul %16, %13, %cst_9 {dimension_numbers = #tpu.dot_dimension_numbers<[1], [0], [0], [1], [0, 0, 1, 1], [], []>} : vector<32x64xf32>, vector<64x1024xf32>, vector<32x1024xf32> -> vector<32x1024xf32>
    %18 = arith.mulf %15, %17 : vector<32x1024xf32>
    %cst_10 = arith.constant dense<0.000000e+00> : vector<1024xf32>
    %19 = vector.multi_reduction <add>, %18, %cst_10 [0] : vector<32x1024xf32> to vector<1024xf32>
    %20 = vector.shape_cast %19 : vector<1024xf32> to vector<1x1024xf32>
    %c0_11 = arith.constant 0 : index
    %c0_12 = arith.constant 0 : index
    %c0_13 = arith.constant 0 : index
    %21 = vector.load %arg5[%c0_11, %c0_12, %c0_13] : memref<1x1x1024xf32, #tpu.memory_space<vmem>>, vector<1x1x1024xf32>
    %22 = vector.shape_cast %21 : vector<1x1x1024xf32> to vector<1x1024xf32>
    %23 = arith.addf %20, %22 : vector<1x1024xf32>
    %cst_14 = arith.constant 1.000000e+00 : f32
    %cst_15 = arith.constant 5.000000e+00 : f32
    %24 = vector.broadcast %cst_14 : f32 to vector<1x1024xf32>
    %25 = arith.maximumf %24, %23 : vector<1x1024xf32>
    %26 = vector.broadcast %cst_15 : f32 to vector<1x1024xf32>
    %27 = arith.minimumf %26, %25 : vector<1x1024xf32>
    %28 = vector.shape_cast %27 : vector<1x1024xf32> to vector<1x1x1024xf32>
    %c0_16 = arith.constant 0 : index
    %c0_17 = arith.constant 0 : index
    %c0_18 = arith.constant 0 : index
    %29 = vector.load %arg6[%c0_16, %c0_17, %c0_18] : memref<1x1x1024xf32, #tpu.memory_space<vmem>>, vector<1x1x1024xf32>
    tpu.vector_store %arg6[%c0_16, %c0_17, %c0_18], %28 {strides = array<i32>} : memref<1x1x1024xf32, #tpu.memory_space<vmem>>, vector<1x1x1024xf32>,
    return
  }
  func.func @transform_0(%arg0: i32) -> (i32, i32) {
    %c0_i32 = arith.constant 0 : i32
    %c0_i32_0 = arith.constant 0 : i32
    %c0_i32_1 = arith.constant 0 : i32
    return %c0_i32, %c0_i32_0 : i32, i32
  }
  func.func @transform_1(%arg0: i32) -> (i32, i32) {
    %c0_i32 = arith.constant 0 : i32
    %c0_i32_0 = arith.constant 0 : i32
    %c0_i32_1 = arith.constant 0 : i32
    return %c0_i32, %c0_i32_0 : i32, i32
  }
  func.func @transform_2(%arg0: i32) -> (i32, i32, i32) {
    %c0_i32 = arith.constant 0 : i32
    %c0_i32_0 = arith.constant 0 : i32
    %c0_i32_1 = arith.constant 0 : i32
    return %arg0, %c0_i32, %c0_i32_0 : i32, i32, i32
  }
  func.func @transform_3(%arg0: i32) -> (i32, i32, i32) {
    %c0_i32 = arith.constant 0 : i32
    %c0_i32_0 = arith.constant 0 : i32
    %c0_i32_1 = arith.constant 0 : i32
    return %arg0, %c0_i32, %c0_i32_0 : i32, i32, i32
  }
  func.func @transform_4(%arg0: i32) -> (i32, i32, i32) {
    %c0_i32 = arith.constant 0 : i32
    %c0_i32_0 = arith.constant 0 : i32
    %c0_i32_1 = arith.constant 0 : i32
    return %arg0, %c0_i32, %c0_i32_0 : i32, i32, i32
  }
  func.func @transform_5(%arg0: i32) -> (i32, i32, i32) {
    %c0_i32 = arith.constant 0 : i32
    %c0_i32_0 = arith.constant 0 : i32
    %c0_i32_1 = arith.constant 0 : i32
    return %arg0, %c0_i32, %c0_i32_0 : i32, i32, i32
  }
}

</mosaic_0001>

<llo_original>
// kernel: tpu_custom_call.1
$region0: #{tpu_custom_call.1}
  #allocation0 [shape = 'u32[]', space=smem, size = 0x4, offset = 0x4, fixed_abs, tag = 'smem constant byte address 0x4 - core index']
  #allocation1 [shape = 'u32[144,128]{1,0:T(1,128)}', space=vmem, size = 0x12000, scoped, tag = 'internal scratch']
  %s0 = inlined_call_operand.hbm [shape: f32[32,64], index: 0, kind: input, shape index: {}]
  %s1 = inlined_call_operand.hbm [shape: f32[32,64], index: 1, kind: input, shape index: {}]
  %s2 = inlined_call_operand.hbm [shape: s32[2,1,1024], index: 2, kind: input, shape index: {}]
  %s3 = inlined_call_operand.hbm [shape: s32[2,1,1024], index: 3, kind: input, shape index: {}]
  %s4 = inlined_call_operand.hbm [shape: f32[2,1,1024], index: 4, kind: input, shape index: {}]
  %s5 = inlined_call_operand.hbm [shape: f32[2,1,1024], index: 5, kind: output, shape index: {}]
  %s6 = sld [smem:[#allocation0]]
  $region73: #{tpu_custom_call.1} parent=0
    _
  %s8 = ssub.s32 1, %s6
  %s9 = scalar_select 0, %s8, %s6
  $region1: #{tpu_custom_call.1} parent=0
    #allocation2 [shape = 'u8[16384]{0}', space=vmem, size = 0x4000, scoped, tag = 'input window, operand 0, single buffered']
    #allocation3 [shape = 's32[2]{0}', space=sflag, size = 0x8, scoped, tag = 'scoped memory for tpu_custom_call.1']
    #allocation4 [shape = 's32[2]{0}', space=sflag, size = 0x8, scoped, tag = 'scoped memory for tpu_custom_call.1']
    #allocation5 [shape = 'u8[16384]{0}', space=vmem, size = 0x4000, scoped, tag = 'input window, operand 1, single buffered']
    #allocation6 [shape = 's32[1]{0}', space=sflag, size = 0x4, scoped, tag = 'scoped memory for tpu_custom_call.1']
    #allocation7 [shape = 'u8[8192]{0}', space=vmem, size = 0x2000, scoped, tag = 'input window, operand 2']
    #allocation8 [shape = 'u8[8192]{0}', space=vmem, size = 0x2000, scoped, tag = 'input window, operand 3']
    #allocation9 [shape = 'u8[8192]{0}', space=vmem, size = 0x2000, scoped, tag = 'input window, operand 4']
    #allocation10 [shape = 'u8[8192]{0}', space=vmem, size = 0x2000, scoped, tag = 'output window, operand 0']
    %10 = vsyncpa [#allocation3], 0
    %11 = vsyncpa [#allocation6], 0
    %12 = vsyncpa [#allocation4], 0
    %s13 = scalar_lea.sflag [#allocation4], 1
    %14 = vsyncpa %s13, 0
    loop: start=0, step=1, limit=4
    $region2: #{tpu_custom_call.1} parent=1 // loop_pre_header
      _
    $region3: #{tpu_custom_call.1} parent=1 // loop_header
      %s16 = sphi 0, %s20
      %p17 = scmp.ge.s32.totalorder %s16, 4
      %s24 = sphi 0, %s24
      %s26 = sphi 0, %s24
      %s27 = sphi 0, %s26
      %s41 = sphi 0, %s27
      %s45 = sphi 0, %s45
      %s47 = sphi 0, %s45
      %s48 = sphi 0, %s47
      %s62 = sphi 0, %s48
      %s68 = sphi 0, %s70
      %s71 = sphi 0, %s68
      %s72 = sphi 0, %s71
      %s88 = sphi 0, %s72
      %s94 = sphi 0, %s96
      %s97 = sphi 0, %s94
      %s98 = sphi 0, %s97
      %s114 = sphi 0, %s98
      %s120 = sphi 0, %s122
      %s123 = sphi 0, %s120
      %s124 = sphi 0, %s123
      %s140 = sphi 0, %s124
      %s146 = sphi 0, %s148
      %s149 = sphi 0, %s146
      %s150 = sphi 0, %s149
      %s166 = sphi 0, %s150
    $region4: #{tpu_custom_call.1} parent=1 // loop_header_branch
      %19 = sbr.rel (%p17) target = $region8
    $region5: #{tpu_custom_call.1} parent=1 // loop_body
      %s21 = ssub.s32 %s16, 1
      %s22 = ssub.s32 %s16, 2
      %s23 = sadd.s32 %s16, 1
      %s25 = sadd.s32 %s24, 1
      %p28 = scmp.eq.s32.totalorder %s16, 1
      %p29 = scmp.ne.s32.totalorder %s24, %s26
      %p30 = scmp.eq.s32.totalorder %s16, 0
      %p31 = por %p29, %p30
      %p32 = scmp.ne.s32.totalorder %s24, %s26
      %p33 = scmp.eq.s32.totalorder %s21, 1
      %p34 = por %p32, %p33
      %p35 = scmp.ne.s32.totalorder %s26, %s27
      %p36 = scmp.eq.s32.totalorder %s21, 0
      %p37 = por %p35, %p36
      %p38 = scmp.ne.s32.totalorder %s26, %s27
      %p39 = scmp.eq.s32.totalorder %s22, 1
      %p40 = por %p38, %p39
      %p42 = scmp.ne.s32.totalorder %s27, %s41
      %p43 = scmp.eq.s32.totalorder %s22, 0
      %p44 = por %p42, %p43
      %s46 = sadd.s32 %s45, 1
      %p49 = scmp.eq.s32.totalorder %s16, 1
      %p50 = scmp.ne.s32.totalorder %s45, %s47
      %p51 = scmp.eq.s32.totalorder %s16, 0
      %p52 = por %p50, %p51
      %p53 = scmp.ne.s32.totalorder %s45, %s47
      %p54 = scmp.eq.s32.totalorder %s21, 1
      %p55 = por %p53, %p54
      %p56 = scmp.ne.s32.totalorder %s47, %s48
      %p57 = scmp.eq.s32.totalorder %s21, 0
      %p58 = por %p56, %p57
      %p59 = scmp.ne.s32.totalorder %s47, %s48
      %p60 = scmp.eq.s32.totalorder %s22, 1
      %p61 = por %p59, %p60
      %p63 = scmp.ne.s32.totalorder %s48, %s62
      %p64 = scmp.eq.s32.totalorder %s22, 0
      %p65 = por %p63, %p64
      %s66 = ssub.s32 %s16, %s23
      %p67 = scmp.eq.s32.totalorder %s66, 0
      %s69 = sadd.s32 %s68, 1
      %s70 = scalar_select %p67, %s68, %s69
      %p73 = pneg %p67
      %p74 = scmp.eq.s32.totalorder %s16, 1
      %p75 = por %p73, %p74
      %p76 = scmp.ne.s32.totalorder %s68, %s71
      %p77 = scmp.eq.s32.totalorder %s16, 0
      %p78 = por %p76, %p77
      %p79 = scmp.ne.s32.totalorder %s68, %s71
      %p80 = scmp.eq.s32.totalorder %s21, 1
      %p81 = por %p79, %p80
      %p82 = scmp.ne.s32.totalorder %s71, %s72
      %p83 = scmp.eq.s32.totalorder %s21, 0
      %p84 = por %p82, %p83
      %p85 = scmp.ne.s32.totalorder %s71, %s72
      %p86 = scmp.eq.s32.totalorder %s22, 1
      %p87 = por %p85, %p86
      %p89 = scmp.ne.s32.totalorder %s72, %s88
      %p90 = scmp.eq.s32.totalorder %s22, 0
      %p91 = por %p89, %p90
      %s92 = ssub.s32 %s16, %s23
      %p93 = scmp.eq.s32.totalorder %s92, 0
      %s95 = sadd.s32 %s94, 1
      %s96 = scalar_select %p93, %s94, %s95
      %p99 = pneg %p93
      %p100 = scmp.eq.s32.totalorder %s16, 1
      %p101 = por %p99, %p100
      %p102 = scmp.ne.s32.totalorder %s94, %s97
      %p103 = scmp.eq.s32.totalorder %s16, 0
      %p104 = por %p102, %p103
      %p105 = scmp.ne.s32.totalorder %s94, %s97
      %p106 = scmp.eq.s32.totalorder %s21, 1
      %p107 = por %p105, %p106
      %p108 = scmp.ne.s32.totalorder %s97, %s98
      %p109 = scmp.eq.s32.totalorder %s21, 0
      %p110 = por %p108, %p109
      %p111 = scmp.ne.s32.totalorder %s97, %s98
      %p112 = scmp.eq.s32.totalorder %s22, 1
      %p113 = por %p111, %p112
      %p115 = scmp.ne.s32.totalorder %s98, %s114
      %p116 = scmp.eq.s32.totalorder %s22, 0
      %p117 = por %p115, %p116
      %s118 = ssub.s32 %s16, %s23
      %p119 = scmp.eq.s32.totalorder %s118, 0
      %s121 = sadd.s32 %s120, 1
      %s122 = scalar_select %p119, %s120, %s121
      %p125 = pneg %p119
      %p126 = scmp.eq.s32.totalorder %s16, 1
      %p127 = por %p125, %p126
      %p128 = scmp.ne.s32.totalorder %s120, %s123
      %p129 = scmp.eq.s32.totalorder %s16, 0
      %p130 = por %p128, %p129
      %p131 = scmp.ne.s32.totalorder %s120, %s123
      %p132 = scmp.eq.s32.totalorder %s21, 1
      %p133 = por %p131, %p132
      %p134 = scmp.ne.s32.totalorder %s123, %s124
      %p135 = scmp.eq.s32.totalorder %s21, 0
      %p136 = por %p134, %p135
      %p137 = scmp.ne.s32.totalorder %s123, %s124
      %p138 = scmp.eq.s32.totalorder %s22, 1
      %p139 = por %p137, %p138
      %p141 = scmp.ne.s32.totalorder %s124, %s140
      %p142 = scmp.eq.s32.totalorder %s22, 0
      %p143 = por %p141, %p142
      %s144 = ssub.s32 %s16, %s23
      %p145 = scmp.eq.s32.totalorder %s144, 0
      %s147 = sadd.s32 %s146, 1
      %s148 = scalar_select %p145, %s146, %s147
      %p151 = pneg %p145
      %p152 = scmp.eq.s32.totalorder %s16, 1
      %p153 = por %p151, %p152
      %p154 = scmp.ne.s32.totalorder %s146, %s149
      %p155 = scmp.eq.s32.totalorder %s16, 0
      %p156 = por %p154, %p155
      %p157 = scmp.ne.s32.totalorder %s146, %s149
      %p158 = scmp.eq.s32.totalorder %s21, 1
      %p159 = por %p157, %p158
      %p160 = scmp.ne.s32.totalorder %s149, %s150
      %p161 = scmp.eq.s32.totalorder %s21, 0
      %p162 = por %p160, %p161
      %p163 = scmp.ne.s32.totalorder %s149, %s150
      %p164 = scmp.eq.s32.totalorder %s22, 1
      %p165 = por %p163, %p164
      %p167 = scmp.ne.s32.totalorder %s150, %s166
      %p168 = scmp.eq.s32.totalorder %s22, 0
      %p169 = por %p167, %p168
      %p170 = scmp.le.s32.totalorder 1, %s16
      %p171 = scmp.lt.s32.totalorder %s16, 3
      %p172 = pnand %p170, %p171
      %p173 = pneg %p172
      // Predicated region
      $region9: #{tpu_custom_call.1} parent=5 // pred_check
        _
      $region10: #{tpu_custom_call.1} parent=5 // pred_check_branch
        %175 = sbr.rel (%p172) target = $region12
      $region11: #{tpu_custom_call.1} parent=5 // pred_region
        %s176 = ssub.s32 %s16, 1
        // Predicated region
        $region13: #{tpu_custom_call.1} parent=11 // pred_check
          %p177 = pneg %p37
        $region14: #{tpu_custom_call.1} parent=11 // pred_check_branch
          %179 = sbr.rel (%p177) target = $region16
        $region15: #{tpu_custom_call.1} parent=11 // pred_region
          %s181 = ssub.s32 512, 512
          %182 = vsyncadd [#allocation3], %s181
          %s183 = sshll.u32 [#allocation2], 4
          %s184 = int_to_ptr.vmem [resolvable:$true] %s183
          %189 = dma.hbm_to_vmem [thread:$0]  %s0, 512, %s184, [#allocation3], 128, 128, 8
        $region16: #{tpu_custom_call.1} parent=11 // pred_fallthru
          _
        // Predicated region
        $region17: #{tpu_custom_call.1} parent=11 // pred_check
          %p190 = pneg %p58
        $region18: #{tpu_custom_call.1} parent=11 // pred_check_branch
          %192 = sbr.rel (%p190) target = $region20
        $region19: #{tpu_custom_call.1} parent=11 // pred_region
          %s194 = ssub.s32 512, 512
          %195 = vsyncadd [#allocation6], %s194
          %s196 = sshll.u32 [#allocation5], 4
          %s197 = int_to_ptr.vmem [resolvable:$true] %s196
          %202 = dma.hbm_to_vmem [thread:$0]  %s1, 512, %s197, [#allocation6], 128, 128, 8
        $region20: #{tpu_custom_call.1} parent=11 // pred_fallthru
          _
      $region12: #{tpu_custom_call.1} parent=5 // pred_fallthru
        _
      %p203 = scmp.lt.s32.totalorder %s16, 2
      // Predicated region
      $region21: #{tpu_custom_call.1} parent=5 // pred_check
        %p204 = pneg %p203
      $region22: #{tpu_custom_call.1} parent=5 // pred_check_branch
        %206 = sbr.rel (%p204) target = $region24
      $region23: #{tpu_custom_call.1} parent=5 // pred_region
        // Predicated region
        $region25: #{tpu_custom_call.1} parent=23 // pred_check
          %p207 = pneg %p78
        $region26: #{tpu_custom_call.1} parent=23 // pred_check_branch
          %209 = sbr.rel (%p207) target = $region28
        $region27: #{tpu_custom_call.1} parent=23 // pred_region
          %s210 = sand.u32 %s16, 1
          %s211 = scalar_lea.sflag [#allocation3], %s210
          %s212 = sand.u32 %s68, 1
          %s213 = smul.addr %s212, 8
          %s214 = scalar_lea.vmem [#allocation7], %s213
          %s216 = ssub.s32 128, 128
          %217 = vsyncadd %s211, %s216
          %s218 = smul.addr %s16, 8
          %s219 = smul.addr %s218, 16
          %s220 = scalar_lea.hbm %s2, %s219
          %s222 = sshll.u32 %s214, 4
          %s223 = int_to_ptr.vmem [resolvable:$true] %s222
          %225 = dma.hbm_to_vmem [thread:$0]  %s220, 128, %s223, %s211
        $region28: #{tpu_custom_call.1} parent=23 // pred_fallthru
          _
        // Predicated region
        $region29: #{tpu_custom_call.1} parent=23 // pred_check
          %p226 = pneg %p104
        $region30: #{tpu_custom_call.1} parent=23 // pred_check_branch
          %228 = sbr.rel (%p226) target = $region32
        $region31: #{tpu_custom_call.1} parent=23 // pred_region
          %s229 = sand.u32 %s16, 1
          %s230 = scalar_lea.sflag [#allocation3], %s229
          %s231 = sand.u32 %s94, 1
          %s232 = smul.addr %s231, 8
          %s233 = scalar_lea.vmem [#allocation8], %s232
          %s235 = ssub.s32 128, 128
          %236 = vsyncadd %s230, %s235
          %s237 = smul.addr %s16, 8
          %s238 = smul.addr %s237, 16
          %s239 = scalar_lea.hbm %s3, %s238
          %s241 = sshll.u32 %s233, 4
          %s242 = int_to_ptr.vmem [resolvable:$true] %s241
          %244 = dma.hbm_to_vmem [thread:$0]  %s239, 128, %s242, %s230
        $region32: #{tpu_custom_call.1} parent=23 // pred_fallthru
          _
        // Predicated region
        $region33: #{tpu_custom_call.1} parent=23 // pred_check
          %p245 = pneg %p130
        $region34: #{tpu_custom_call.1} parent=23 // pred_check_branch
          %247 = sbr.rel (%p245) target = $region36
        $region35: #{tpu_custom_call.1} parent=23 // pred_region
          %s248 = sand.u32 %s16, 1
          %s249 = scalar_lea.sflag [#allocation3], %s248
          %s250 = sand.u32 %s120, 1
          %s251 = smul.addr %s250, 8
          %s252 = scalar_lea.vmem [#allocation9], %s251
          %s254 = ssub.s32 128, 128
          %255 = vsyncadd %s249, %s254
          %s256 = smul.addr %s16, 8
          %s257 = smul.addr %s256, 16
          %s258 = scalar_lea.hbm %s4, %s257
          %s260 = sshll.u32 %s252, 4
          %s261 = int_to_ptr.vmem [resolvable:$true] %s260
          %263 = dma.hbm_to_vmem [thread:$0]  %s258, 128, %s261, %s249
        $region36: #{tpu_custom_call.1} parent=23 // pred_fallthru
          _
      $region24: #{tpu_custom_call.1} parent=5 // pred_fallthru
        _
      %p264 = scmp.le.s32.totalorder 1, %s16
      %p265 = scmp.lt.s32.totalorder %s16, 3
      %p266 = pnand %p264, %p265
      %p267 = pneg %p266
      // Predicated region
      $region37: #{tpu_custom_call.1} parent=5 // pred_check
        _
      $region38: #{tpu_custom_call.1} parent=5 // pred_check_branch
        %269 = sbr.rel (%p266) target = $region40
      $region39: #{tpu_custom_call.1} parent=5 // pred_region
        %s270 = ssub.s32 %s16, 1
        // Predicated region
        $region41: #{tpu_custom_call.1} parent=39 // pred_check
          %p271 = pneg %p37
        $region42: #{tpu_custom_call.1} parent=39 // pred_check_branch
          %273 = sbr.rel (%p271) target = $region44
        $region43: #{tpu_custom_call.1} parent=39 // pred_region
          %274 = dma.done [#allocation3], 512
        $region44: #{tpu_custom_call.1} parent=39 // pred_fallthru
          _
        // Predicated region
        $region45: #{tpu_custom_call.1} parent=39 // pred_check
          %p275 = pneg %p58
        $region46: #{tpu_custom_call.1} parent=39 // pred_check_branch
          %277 = sbr.rel (%p275) target = $region48
        $region47: #{tpu_custom_call.1} parent=39 // pred_region
          %278 = dma.done [#allocation6], 512
        $region48: #{tpu_custom_call.1} parent=39 // pred_fallthru
          _
        %s279 = sand.u32 %s21, 1
        %s280 = scalar_lea.sflag [#allocation3], %s279
        %s281 = sand.u32 %s71, 1
        %s282 = smul.addr %s281, 8
        %s283 = scalar_lea.vmem [#allocation7], %s282
        // Predicated region
        $region49: #{tpu_custom_call.1} parent=39 // pred_check
          %p284 = pneg %p84
        $region50: #{tpu_custom_call.1} parent=39 // pred_check_branch
          %286 = sbr.rel (%p284) target = $region52
        $region51: #{tpu_custom_call.1} parent=39 // pred_region
          %287 = dma.done %s280, 128
        $region52: #{tpu_custom_call.1} parent=39 // pred_fallthru
          _
        %s288 = sand.u32 %s21, 1
        %s289 = scalar_lea.sflag [#allocation3], %s288
        %s290 = sand.u32 %s97, 1
        %s291 = smul.addr %s290, 8
        %s292 = scalar_lea.vmem [#allocation8], %s291
        // Predicated region
        $region53: #{tpu_custom_call.1} parent=39 // pred_check
          %p293 = pneg %p110
        $region54: #{tpu_custom_call.1} parent=39 // pred_check_branch
          %295 = sbr.rel (%p293) target = $region56
        $region55: #{tpu_custom_call.1} parent=39 // pred_region
          %296 = dma.done %s289, 128
        $region56: #{tpu_custom_call.1} parent=39 // pred_fallthru
          _
        %s297 = sand.u32 %s21, 1
        %s298 = scalar_lea.sflag [#allocation3], %s297
        %s299 = sand.u32 %s123, 1
        %s300 = smul.addr %s299, 8
        %s301 = scalar_lea.vmem [#allocation9], %s300
        // Predicated region
        $region57: #{tpu_custom_call.1} parent=39 // pred_check
          %p302 = pneg %p136
        $region58: #{tpu_custom_call.1} parent=39 // pred_check_branch
          %304 = sbr.rel (%p302) target = $region60
        $region59: #{tpu_custom_call.1} parent=39 // pred_region
          %305 = dma.done %s298, 128
        $region60: #{tpu_custom_call.1} parent=39 // pred_fallthru
          _
        %p306 = pneg %p37
        %p307 = pneg %p34
        %p308 = pneg %p58
        %p309 = pneg %p55
        %s310 = sand.u32 %s21, 1
        %s311 = scalar_lea.sflag [#allocation3], %s310
        %s312 = sand.u32 %s71, 1
        %s313 = smul.addr %s312, 8
        %s314 = scalar_lea.vmem [#allocation7], %s313
        %p315 = pneg %p84
        %p316 = pneg %p81
        %s317 = sand.u32 %s21, 1
        %s318 = scalar_lea.sflag [#allocation3], %s317
        %s319 = sand.u32 %s97, 1
        %s320 = smul.addr %s319, 8
        %s321 = scalar_lea.vmem [#allocation8], %s320
        %p322 = pneg %p110
        %p323 = pneg %p107
        %s324 = sand.u32 %s21, 1
        %s325 = scalar_lea.sflag [#allocation3], %s324
        %s326 = sand.u32 %s123, 1
        %s327 = smul.addr %s326, 8
        %s328 = scalar_lea.vmem [#allocation9], %s327
        %p329 = pneg %p136
        %p330 = pneg %p133
        %p331 = pneg %p162
        %p332 = pneg %p159
        %s333 = sand.u32 %s149, 1
        %s334 = scalar_lea.sflag [#allocation4], %s333
        %s335 = sand.u32 %s149, 1
        %s336 = smul.addr %s335, 8
        %s337 = scalar_lea.vmem [#allocation10], %s336
        %v338 = vld [vmem:[%s283] sm:$0xff]
        %v339 = vld [vmem:[%s292] sm:$0xff]
        %v340 = vlaneseq
        %v341 = vshrl.u32 %v340, 7
        %v342 = vadd.s32 %v341, 8
        %v343 = vadd.s32 %v341, 16
        %v344 = vadd.s32 %v341, 24
        %v345 = vadd.s32 %v341, 32
        %v346 = vadd.s32 %v341, 40
        %v347 = vadd.s32 %v341, 48
        %v348 = vadd.s32 %v341, 56
        %v349 = vlaneseq
        %v350 = vshrl.u32 %v349, 7
        %v351 = vsub.s32 0, %v350
        %v352 = vrot.slane %v338, %v351
        %v353 = vlaneseq
        %v354 = vshrl.u32 %v353, 7
        %v355 = vsub.s32 1, %v354
        %v356 = vrot.slane %v338, %v355
        %v357 = vlaneseq
        %v358 = vshrl.u32 %v357, 7
        %v359 = vsub.s32 2, %v358
        %v360 = vrot.slane %v338, %v359
        %v361 = vlaneseq
        %v362 = vshrl.u32 %v361, 7
        %v363 = vsub.s32 3, %v362
        %v364 = vrot.slane %v338, %v363
        %v365 = vlaneseq
        %v366 = vshrl.u32 %v365, 7
        %v367 = vsub.s32 4, %v366
        %v368 = vrot.slane %v338, %v367
        %v369 = vlaneseq
        %v370 = vshrl.u32 %v369, 7
        %v371 = vsub.s32 5, %v370
        %v372 = vrot.slane %v338, %v371
        %v373 = vlaneseq
        %v374 = vshrl.u32 %v373, 7
        %v375 = vsub.s32 6, %v374
        %v376 = vrot.slane %v338, %v375
        %v377 = vlaneseq
        %v378 = vshrl.u32 %v377, 7
        %v379 = vsub.s32 7, %v378
        %v380 = vrot.slane %v338, %v379
        %vm381 = vcmp.eq.s32.totalorder %v341, %v352
        %vm382 = vcmp.eq.s32.totalorder %v341, %v356
        %vm383 = vcmp.eq.s32.totalorder %v341, %v360
        %vm384 = vcmp.eq.s32.totalorder %v341, %v364
        %vm385 = vcmp.eq.s32.totalorder %v341, %v368
        %vm386 = vcmp.eq.s32.totalorder %v341, %v372
        %vm387 = vcmp.eq.s32.totalorder %v341, %v376
        %vm388 = vcmp.eq.s32.totalorder %v341, %v380
        %vm389 = vcmp.eq.s32.totalorder %v342, %v352
        %vm390 = vcmp.eq.s32.totalorder %v342, %v356
        %vm391 = vcmp.eq.s32.totalorder %v342, %v360
        %vm392 = vcmp.eq.s32.totalorder %v342, %v364
        %vm393 = vcmp.eq.s32.totalorder %v342, %v368
        %vm394 = vcmp.eq.s32.totalorder %v342, %v372
        %vm395 = vcmp.eq.s32.totalorder %v342, %v376
        %vm396 = vcmp.eq.s32.totalorder %v342, %v380
        %vm397 = vcmp.eq.s32.totalorder %v343, %v352
        %vm398 = vcmp.eq.s32.totalorder %v343, %v356
        %vm399 = vcmp.eq.s32.totalorder %v343, %v360
        %vm400 = vcmp.eq.s32.totalorder %v343, %v364
        %vm401 = vcmp.eq.s32.totalorder %v343, %v368
        %vm402 = vcmp.eq.s32.totalorder %v343, %v372
        %vm403 = vcmp.eq.s32.totalorder %v343, %v376
        %vm404 = vcmp.eq.s32.totalorder %v343, %v380
        %vm405 = vcmp.eq.s32.totalorder %v344, %v352
        %vm406 = vcmp.eq.s32.totalorder %v344, %v356
        %vm407 = vcmp.eq.s32.totalorder %v344, %v360
        %vm408 = vcmp.eq.s32.totalorder %v344, %v364
        %vm409 = vcmp.eq.s32.totalorder %v344, %v368
        %vm410 = vcmp.eq.s32.totalorder %v344, %v372
        %vm411 = vcmp.eq.s32.totalorder %v344, %v376
        %vm412 = vcmp.eq.s32.totalorder %v344, %v380
        %vm413 = vcmp.eq.s32.totalorder %v345, %v352
        %vm414 = vcmp.eq.s32.totalorder %v345, %v356
        %vm415 = vcmp.eq.s32.totalorder %v345, %v360
        %vm416 = vcmp.eq.s32.totalorder %v345, %v364
        %vm417 = vcmp.eq.s32.totalorder %v345, %v368
        %vm418 = vcmp.eq.s32.totalorder %v345, %v372
        %vm419 = vcmp.eq.s32.totalorder %v345, %v376
        %vm420 = vcmp.eq.s32.totalorder %v345, %v380
        %vm421 = vcmp.eq.s32.totalorder %v346, %v352
        %vm422 = vcmp.eq.s32.totalorder %v346, %v356
        %vm423 = vcmp.eq.s32.totalorder %v346, %v360
        %vm424 = vcmp.eq.s32.totalorder %v346, %v364
        %vm425 = vcmp.eq.s32.totalorder %v346, %v368
        %vm426 = vcmp.eq.s32.totalorder %v346, %v372
        %vm427 = vcmp.eq.s32.totalorder %v346, %v376
        %vm428 = vcmp.eq.s32.totalorder %v346, %v380
        %vm429 = vcmp.eq.s32.totalorder %v347, %v352
        %vm430 = vcmp.eq.s32.totalorder %v347, %v356
        %vm431 = vcmp.eq.s32.totalorder %v347, %v360
        %vm432 = vcmp.eq.s32.totalorder %v347, %v364
        %vm433 = vcmp.eq.s32.totalorder %v347, %v368
        %vm434 = vcmp.eq.s32.totalorder %v347, %v372
        %vm435 = vcmp.eq.s32.totalorder %v347, %v376
        %vm436 = vcmp.eq.s32.totalorder %v347, %v380
        %vm437 = vcmp.eq.s32.totalorder %v348, %v352
        %vm438 = vcmp.eq.s32.totalorder %v348, %v356
        %vm439 = vcmp.eq.s32.totalorder %v348, %v360
        %vm440 = vcmp.eq.s32.totalorder %v348, %v364
        %vm441 = vcmp.eq.s32.totalorder %v348, %v368
        %vm442 = vcmp.eq.s32.totalorder %v348, %v372
        %vm443 = vcmp.eq.s32.totalorder %v348, %v376
        %vm444 = vcmp.eq.s32.totalorder %v348, %v380
        %v445 = vsel %vm381, 1, 0
        %v446 = vsel %vm382, 1, 0
        %v447 = vsel %vm383, 1, 0
        %v448 = vsel %vm384, 1, 0
        %v449 = vsel %vm385, 1, 0
        %v450 = vsel %vm386, 1, 0
        %v451 = vsel %vm387, 1, 0
        %v452 = vsel %vm388, 1, 0
        %v453 = vsel %vm389, 1, 0
        %v454 = vsel %vm390, 1, 0
        %v455 = vsel %vm391, 1, 0
        %v456 = vsel %vm392, 1, 0
        %v457 = vsel %vm393, 1, 0
        %v458 = vsel %vm394, 1, 0
        %v459 = vsel %vm395, 1, 0
        %v460 = vsel %vm396, 1, 0
        %v461 = vsel %vm397, 1, 0
        %v462 = vsel %vm398, 1, 0
        %v463 = vsel %vm399, 1, 0
        %v464 = vsel %vm400, 1, 0
        %v465 = vsel %vm401, 1, 0
        %v466 = vsel %vm402, 1, 0
        %v467 = vsel %vm403, 1, 0
        %v468 = vsel %vm404, 1, 0
        %v469 = vsel %vm405, 1, 0
        %v470 = vsel %vm406, 1, 0
        %v471 = vsel %vm407, 1, 0
        %v472 = vsel %vm408, 1, 0
        %v473 = vsel %vm409, 1, 0
        %v474 = vsel %vm410, 1, 0
        %v475 = vsel %vm411, 1, 0
        %v476 = vsel %vm412, 1, 0
        %v477 = vsel %vm413, 1, 0
        %v478 = vsel %vm414, 1, 0
        %v479 = vsel %vm415, 1, 0
        %v480 = vsel %vm416, 1, 0
        %v481 = vsel %vm417, 1, 0
        %v482 = vsel %vm418, 1, 0
        %v483 = vsel %vm419, 1, 0
        %v484 = vsel %vm420, 1, 0
        %v485 = vsel %vm421, 1, 0
        %v486 = vsel %vm422, 1, 0
        %v487 = vsel %vm423, 1, 0
        %v488 = vsel %vm424, 1, 0
        %v489 = vsel %vm425, 1, 0
        %v490 = vsel %vm426, 1, 0
        %v491 = vsel %vm427, 1, 0
        %v492 = vsel %vm428, 1, 0
        %v493 = vsel %vm429, 1, 0
        %v494 = vsel %vm430, 1, 0
        %v495 = vsel %vm431, 1, 0
        %v496 = vsel %vm432, 1, 0
        %v497 = vsel %vm433, 1, 0
        %v498 = vsel %vm434, 1, 0
        %v499 = vsel %vm435, 1, 0
        %v500 = vsel %vm436, 1, 0
        %v501 = vsel %vm437, 1, 0
        %v502 = vsel %vm438, 1, 0
        %v503 = vsel %vm439, 1, 0
        %v504 = vsel %vm440, 1, 0
        %v505 = vsel %vm441, 1, 0
        %v506 = vsel %vm442, 1, 0
        %v507 = vsel %vm443, 1, 0
        %v508 = vsel %vm444, 1, 0
        %v509 = vcvt.s32.f32 %v445
        %v510 = vcvt.s32.f32 %v446
        %v511 = vcvt.s32.f32 %v447
        %v512 = vcvt.s32.f32 %v448
        %v513 = vcvt.s32.f32 %v449
        %v514 = vcvt.s32.f32 %v450
        %v515 = vcvt.s32.f32 %v451
        %v516 = vcvt.s32.f32 %v452
        %v517 = vcvt.s32.f32 %v453
        %v518 = vcvt.s32.f32 %v454
        %v519 = vcvt.s32.f32 %v455
        %v520 = vcvt.s32.f32 %v456
        %v521 = vcvt.s32.f32 %v457
        %v522 = vcvt.s32.f32 %v458
        %v523 = vcvt.s32.f32 %v459
        %v524 = vcvt.s32.f32 %v460
        %v525 = vcvt.s32.f32 %v461
        %v526 = vcvt.s32.f32 %v462
        %v527 = vcvt.s32.f32 %v463
        %v528 = vcvt.s32.f32 %v464
        %v529 = vcvt.s32.f32 %v465
        %v530 = vcvt.s32.f32 %v466
        %v531 = vcvt.s32.f32 %v467
        %v532 = vcvt.s32.f32 %v468
        %v533 = vcvt.s32.f32 %v469
        %v534 = vcvt.s32.f32 %v470
        %v535 = vcvt.s32.f32 %v471
        %v536 = vcvt.s32.f32 %v472
        %v537 = vcvt.s32.f32 %v473
        %v538 = vcvt.s32.f32 %v474
        %v539 = vcvt.s32.f32 %v475
        %v540 = vcvt.s32.f32 %v476
        %v541 = vcvt.s32.f32 %v477
        %v542 = vcvt.s32.f32 %v478
        %v543 = vcvt.s32.f32 %v479
        %v544 = vcvt.s32.f32 %v480
        %v545 = vcvt.s32.f32 %v481
        %v546 = vcvt.s32.f32 %v482
        %v547 = vcvt.s32.f32 %v483
        %v548 = vcvt.s32.f32 %v484
        %v549 = vcvt.s32.f32 %v485
        %v550 = vcvt.s32.f32 %v486
        %v551 = vcvt.s32.f32 %v487
        %v552 = vcvt.s32.f32 %v488
        %v553 = vcvt.s32.f32 %v489
        %v554 = vcvt.s32.f32 %v490
        %v555 = vcvt.s32.f32 %v491
        %v556 = vcvt.s32.f32 %v492
        %v557 = vcvt.s32.f32 %v493
        %v558 = vcvt.s32.f32 %v494
        %v559 = vcvt.s32.f32 %v495
        %v560 = vcvt.s32.f32 %v496
        %v561 = vcvt.s32.f32 %v497
        %v562 = vcvt.s32.f32 %v498
        %v563 = vcvt.s32.f32 %v499
        %v564 = vcvt.s32.f32 %v500
        %v565 = vcvt.s32.f32 %v501
        %v566 = vcvt.s32.f32 %v502
        %v567 = vcvt.s32.f32 %v503
        %v568 = vcvt.s32.f32 %v504
        %v569 = vcvt.s32.f32 %v505
        %v570 = vcvt.s32.f32 %v506
        %v571 = vcvt.s32.f32 %v507
        %v572 = vcvt.s32.f32 %v508
        %v573 = vlaneseq
        %v574 = vshrl.u32 %v573, 7
        %v575 = vsub.s32 0, %v574
        %v576 = vrot.slane %v339, %v575
        %v577 = vlaneseq
        %v578 = vshrl.u32 %v577, 7
        %v579 = vsub.s32 1, %v578
        %v580 = vrot.slane %v339, %v579
        %v581 = vlaneseq
        %v582 = vshrl.u32 %v581, 7
        %v583 = vsub.s32 2, %v582
        %v584 = vrot.slane %v339, %v583
        %v585 = vlaneseq
        %v586 = vshrl.u32 %v585, 7
        %v587 = vsub.s32 3, %v586
        %v588 = vrot.slane %v339, %v587
        %v589 = vlaneseq
        %v590 = vshrl.u32 %v589, 7
        %v591 = vsub.s32 4, %v590
        %v592 = vrot.slane %v339, %v591
        %v593 = vlaneseq
        %v594 = vshrl.u32 %v593, 7
        %v595 = vsub.s32 5, %v594
        %v596 = vrot.slane %v339, %v595
        %v597 = vlaneseq
        %v598 = vshrl.u32 %v597, 7
        %v599 = vsub.s32 6, %v598
        %v600 = vrot.slane %v339, %v599
        %v601 = vlaneseq
        %v602 = vshrl.u32 %v601, 7
        %v603 = vsub.s32 7, %v602
        %v604 = vrot.slane %v339, %v603
        %vm605 = vcmp.eq.s32.totalorder %v341, %v576
        %vm606 = vcmp.eq.s32.totalorder %v341, %v580
        %vm607 = vcmp.eq.s32.totalorder %v341, %v584
        %vm608 = vcmp.eq.s32.totalorder %v341, %v588
        %vm609 = vcmp.eq.s32.totalorder %v341, %v592
        %vm610 = vcmp.eq.s32.totalorder %v341, %v596
        %vm611 = vcmp.eq.s32.totalorder %v341, %v600
        %vm612 = vcmp.eq.s32.totalorder %v341, %v604
        %vm613 = vcmp.eq.s32.totalorder %v342, %v576
        %vm614 = vcmp.eq.s32.totalorder %v342, %v580
        %vm615 = vcmp.eq.s32.totalorder %v342, %v584
        %vm616 = vcmp.eq.s32.totalorder %v342, %v588
        %vm617 = vcmp.eq.s32.totalorder %v342, %v592
        %vm618 = vcmp.eq.s32.totalorder %v342, %v596
        %vm619 = vcmp.eq.s32.totalorder %v342, %v600
        %vm620 = vcmp.eq.s32.totalorder %v342, %v604
        %vm621 = vcmp.eq.s32.totalorder %v343, %v576
        %vm622 = vcmp.eq.s32.totalorder %v343, %v580
        %vm623 = vcmp.eq.s32.totalorder %v343, %v584
        %vm624 = vcmp.eq.s32.totalorder %v343, %v588
        %vm625 = vcmp.eq.s32.totalorder %v343, %v592
        %vm626 = vcmp.eq.s32.totalorder %v343, %v596
        %vm627 = vcmp.eq.s32.totalorder %v343, %v600
        %vm628 = vcmp.eq.s32.totalorder %v343, %v604
        %vm629 = vcmp.eq.s32.totalorder %v344, %v576
        %vm630 = vcmp.eq.s32.totalorder %v344, %v580
        %vm631 = vcmp.eq.s32.totalorder %v344, %v584
        %vm632 = vcmp.eq.s32.totalorder %v344, %v588
        %vm633 = vcmp.eq.s32.totalorder %v344, %v592
        %vm634 = vcmp.eq.s32.totalorder %v344, %v596
        %vm635 = vcmp.eq.s32.totalorder %v344, %v600
        %vm636 = vcmp.eq.s32.totalorder %v344, %v604
        %vm637 = vcmp.eq.s32.totalorder %v345, %v576
        %vm638 = vcmp.eq.s32.totalorder %v345, %v580
        %vm639 = vcmp.eq.s32.totalorder %v345, %v584
        %vm640 = vcmp.eq.s32.totalorder %v345, %v588
        %vm641 = vcmp.eq.s32.totalorder %v345, %v592
        %vm642 = vcmp.eq.s32.totalorder %v345, %v596
        %vm643 = vcmp.eq.s32.totalorder %v345, %v600
        %vm644 = vcmp.eq.s32.totalorder %v345, %v604
        %vm645 = vcmp.eq.s32.totalorder %v346, %v576
        %vm646 = vcmp.eq.s32.totalorder %v346, %v580
        %vm647 = vcmp.eq.s32.totalorder %v346, %v584
        %vm648 = vcmp.eq.s32.totalorder %v346, %v588
        %vm649 = vcmp.eq.s32.totalorder %v346, %v592
        %vm650 = vcmp.eq.s32.totalorder %v346, %v596
        %vm651 = vcmp.eq.s32.totalorder %v346, %v600
        %vm652 = vcmp.eq.s32.totalorder %v346, %v604
        %vm653 = vcmp.eq.s32.totalorder %v347, %v576
        %vm654 = vcmp.eq.s32.totalorder %v347, %v580
        %vm655 = vcmp.eq.s32.totalorder %v347, %v584
        %vm656 = vcmp.eq.s32.totalorder %v347, %v588
        %vm657 = vcmp.eq.s32.totalorder %v347, %v592
        %vm658 = vcmp.eq.s32.totalorder %v347, %v596
        %vm659 = vcmp.eq.s32.totalorder %v347, %v600
        %vm660 = vcmp.eq.s32.totalorder %v347, %v604
        %vm661 = vcmp.eq.s32.totalorder %v348, %v576
        %vm662 = vcmp.eq.s32.totalorder %v348, %v580
        %vm663 = vcmp.eq.s32.totalorder %v348, %v584
        %vm664 = vcmp.eq.s32.totalorder %v348, %v588
        %vm665 = vcmp.eq.s32.totalorder %v348, %v592
        %vm666 = vcmp.eq.s32.totalorder %v348, %v596
        %vm667 = vcmp.eq.s32.totalorder %v348, %v600
        %vm668 = vcmp.eq.s32.totalorder %v348, %v604
        %v669 = vsel %vm605, 1, 0
        %v670 = vsel %vm606, 1, 0
        %v671 = vsel %vm607, 1, 0
        %v672 = vsel %vm608, 1, 0
        %v673 = vsel %vm609, 1, 0
        %v674 = vsel %vm610, 1, 0
        %v675 = vsel %vm611, 1, 0
        %v676 = vsel %vm612, 1, 0
        %v677 = vsel %vm613, 1, 0
        %v678 = vsel %vm614, 1, 0
        %v679 = vsel %vm615, 1, 0
        %v680 = vsel %vm616, 1, 0
        %v681 = vsel %vm617, 1, 0
        %v682 = vsel %vm618, 1, 0
        %v683 = vsel %vm619, 1, 0
        %v684 = vsel %vm620, 1, 0
        %v685 = vsel %vm621, 1, 0
        %v686 = vsel %vm622, 1, 0
        %v687 = vsel %vm623, 1, 0
        %v688 = vsel %vm624, 1, 0
        %v689 = vsel %vm625, 1, 0
        %v690 = vsel %vm626, 1, 0
        %v691 = vsel %vm627, 1, 0
        %v692 = vsel %vm628, 1, 0
        %v693 = vsel %vm629, 1, 0
        %v694 = vsel %vm630, 1, 0
        %v695 = vsel %vm631, 1, 0
        %v696 = vsel %vm632, 1, 0
        %v697 = vsel %vm633, 1, 0
        %v698 = vsel %vm634, 1, 0
        %v699 = vsel %vm635, 1, 0
        %v700 = vsel %vm636, 1, 0
        %v701 = vsel %vm637, 1, 0
        %v702 = vsel %vm638, 1, 0
        %v703 = vsel %vm639, 1, 0
        %v704 = vsel %vm640, 1, 0
        %v705 = vsel %vm641, 1, 0
        %v706 = vsel %vm642, 1, 0
        %v707 = vsel %vm643, 1, 0
        %v708 = vsel %vm644, 1, 0
        %v709 = vsel %vm645, 1, 0
        %v710 = vsel %vm646, 1, 0
        %v711 = vsel %vm647, 1, 0
        %v712 = vsel %vm648, 1, 0
        %v713 = vsel %vm649, 1, 0
        %v714 = vsel %vm650, 1, 0
        %v715 = vsel %vm651, 1, 0
        %v716 = vsel %vm652, 1, 0
        %v717 = vsel %vm653, 1, 0
        %v718 = vsel %vm654, 1, 0
        %v719 = vsel %vm655, 1, 0
        %v720 = vsel %vm656, 1, 0
        %v721 = vsel %vm657, 1, 0
        %v722 = vsel %vm658, 1, 0
        %v723 = vsel %vm659, 1, 0
        %v724 = vsel %vm660, 1, 0
        %v725 = vsel %vm661, 1, 0
        %v726 = vsel %vm662, 1, 0
        %v727 = vsel %vm663, 1, 0
        %v728 = vsel %vm664, 1, 0
        %v729 = vsel %vm665, 1, 0
        %v730 = vsel %vm666, 1, 0
        %v731 = vsel %vm667, 1, 0
        %v732 = vsel %vm668, 1, 0
        %v733 = vcvt.s32.f32 %v669
        %v734 = vcvt.s32.f32 %v670
        %v735 = vcvt.s32.f32 %v671
        %v736 = vcvt.s32.f32 %v672
        %v737 = vcvt.s32.f32 %v673
        %v738 = vcvt.s32.f32 %v674
        %v739 = vcvt.s32.f32 %v675
        %v740 = vcvt.s32.f32 %v676
        %v741 = vcvt.s32.f32 %v677
        %v742 = vcvt.s32.f32 %v678
        %v743 = vcvt.s32.f32 %v679
        %v744 = vcvt.s32.f32 %v680
        %v745 = vcvt.s32.f32 %v681
        %v746 = vcvt.s32.f32 %v682
        %v747 = vcvt.s32.f32 %v683
        %v748 = vcvt.s32.f32 %v684
        %v749 = vcvt.s32.f32 %v685
        %v750 = vcvt.s32.f32 %v686
        %v751 = vcvt.s32.f32 %v687
        %v752 = vcvt.s32.f32 %v688
        %v753 = vcvt.s32.f32 %v689
        %v754 = vcvt.s32.f32 %v690
        %v755 = vcvt.s32.f32 %v691
        %v756 = vcvt.s32.f32 %v692
        %v757 = vcvt.s32.f32 %v693
        %v758 = vcvt.s32.f32 %v694
        %v759 = vcvt.s32.f32 %v695
        %v760 = vcvt.s32.f32 %v696
        %v761 = vcvt.s32.f32 %v697
        %v762 = vcvt.s32.f32 %v698
        %v763 = vcvt.s32.f32 %v699
        %v764 = vcvt.s32.f32 %v700
        %v765 = vcvt.s32.f32 %v701
        %v766 = vcvt.s32.f32 %v702
        %v767 = vcvt.s32.f32 %v703
        %v768 = vcvt.s32.f32 %v704
        %v769 = vcvt.s32.f32 %v705
        %v770 = vcvt.s32.f32 %v706
        %v771 = vcvt.s32.f32 %v707
        %v772 = vcvt.s32.f32 %v708
        %v773 = vcvt.s32.f32 %v709
        %v774 = vcvt.s32.f32 %v710
        %v775 = vcvt.s32.f32 %v711
        %v776 = vcvt.s32.f32 %v712
        %v777 = vcvt.s32.f32 %v713
        %v778 = vcvt.s32.f32 %v714
        %v779 = vcvt.s32.f32 %v715
        %v780 = vcvt.s32.f32 %v716
        %v781 = vcvt.s32.f32 %v717
        %v782 = vcvt.s32.f32 %v718
        %v783 = vcvt.s32.f32 %v719
        %v784 = vcvt.s32.f32 %v720
        %v785 = vcvt.s32.f32 %v721
        %v786 = vcvt.s32.f32 %v722
        %v787 = vcvt.s32.f32 %v723
        %v788 = vcvt.s32.f32 %v724
        %v789 = vcvt.s32.f32 %v725
        %v790 = vcvt.s32.f32 %v726
        %v791 = vcvt.s32.f32 %v727
        %v792 = vcvt.s32.f32 %v728
        %v793 = vcvt.s32.f32 %v729
        %v794 = vcvt.s32.f32 %v730
        %v795 = vcvt.s32.f32 %v731
        %v796 = vcvt.s32.f32 %v732
        %v797 = vld [vmem:[#allocation2] sm:$0xff]
        %v798 = vld [vmem:[#allocation2 + $0x8] sm:$0xff]
        %v799 = vld [vmem:[#allocation2 + $0x10] sm:$0xff]
        %v800 = vld [vmem:[#allocation2 + $0x18] sm:$0xff]
        %vm801 = vcmask 523264
        %v803 = vsel %vm801, %v797, 0
        %v806 = vsel %vm801, %v798, 0
        %v809 = vsel %vm801, %v799, 0
        %v812 = vsel %vm801, %v800, 0
        %814 = vmatprep.subr.mxu0 0.0
        %815 = vmatpush1.msra.mxu0 0.0
        %816 = vmatprep.subr.mxu0 0.0
        %817 = vmatpush1.msra.mxu0 0.0
        %818 = vmatprep.subr.mxu0 0.0
        %819 = vmatpush1.msra.mxu0 0.0
        %820 = vmatprep.subr.mxu0 0.0
        %821 = vmatpush1.msra.mxu0 0.0
        %822 = vmatprep.subr.mxu0 0.0
        %823 = vmatpush1.msra.mxu0 0.0
        %824 = vmatprep.subr.mxu0 0.0
        %825 = vmatpush1.msra.mxu0 0.0
        %826 = vmatprep.subr.mxu0 0.0
        %827 = vmatpush1.msra.mxu0 0.0
        %828 = vmatprep.subr.mxu0 0.0
        %829 = vmatpush1.msra.mxu0 0.0
        %830 = vmatprep.subr.mxu0 %v566
        %831 = vmatpush1.msra.mxu0 %v565
        %832 = vmatprep.subr.mxu0 %v558
        %833 = vmatpush1.msra.mxu0 %v557
        %834 = vmatprep.subr.mxu0 %v550
        %835 = vmatpush1.msra.mxu0 %v549
        %836 = vmatprep.subr.mxu0 %v542
        %837 = vmatpush1.msra.mxu0 %v541
        %838 = vmatprep.subr.mxu0 %v534
        %839 = vmatpush1.msra.mxu0 %v533
        %840 = vmatprep.subr.mxu0 %v526
        %841 = vmatpush1.msra.mxu0 %v525
        %842 = vmatprep.subr.mxu0 %v518
        %843 = vmatpush1.msra.mxu0 %v517
        %844 = vmatprep.subr.mxu0 %v510
        %845 = vmatpush1.msra.mxu0 %v509
        %846 = vmatprep.subr.mxu0 0.0
        %847 = vmatpush2.msra.mxu0 0.0
        %848 = vmatprep.subr.mxu0 0.0
        %849 = vmatpush2.msra.mxu0 0.0
        %850 = vmatprep.subr.mxu0 0.0
        %851 = vmatpush2.msra.mxu0 0.0
        %852 = vmatprep.subr.mxu0 0.0
        %853 = vmatpush2.msra.mxu0 0.0
        %854 = vmatprep.subr.mxu0 0.0
        %855 = vmatpush2.msra.mxu0 0.0
        %856 = vmatprep.subr.mxu0 0.0
        %857 = vmatpush2.msra.mxu0 0.0
        %858 = vmatprep.subr.mxu0 0.0
        %859 = vmatpush2.msra.mxu0 0.0
        %860 = vmatprep.subr.mxu0 0.0
        %861 = vmatpush2.msra.mxu0 0.0
        %862 = vmatprep.subr.mxu0 0.0
        %863 = vmatpush2.msra.mxu0 0.0
        %864 = vmatprep.subr.mxu0 0.0
        %865 = vmatpush2.msra.mxu0 0.0
        %866 = vmatprep.subr.mxu0 0.0
        %867 = vmatpush2.msra.mxu0 0.0
        %868 = vmatprep.subr.mxu0 0.0
        %869 = vmatpush2.msra.mxu0 0.0
        %870 = vmatprep.subr.mxu0 0.0
        %871 = vmatpush2.msra.mxu0 0.0
        %872 = vmatprep.subr.mxu0 0.0
        %873 = vmatpush2.msra.mxu0 0.0
        %874 = vmatprep.subr.mxu0 0.0
        %875 = vmatpush2.msra.mxu0 0.0
        %876 = vmatprep.subr.mxu0 0.0
        %877 = vmatpush2.msra.mxu0 0.0
        %878 = vmatprep.mubr.f32.mxu0 0.0
        %879 = vmatmul.mubr.f32.gmra.mxu0 %v803
        %v880 = vpop.f32.mrf.mxu0
        %v881 = vadd.f32 0.0, %v880
        %v882 = vpop.f32.mrf.mxu0
        %v883 = vadd.f32 0.0, %v882
        %884 = vmatprep.mubr.f32.mxu0 0.0
        %885 = vmatmul.mubr.f32.gmra.mxu0 %v806
        %v886 = vpop.f32.mrf.mxu0
        %v887 = vadd.f32 0.0, %v886
        %v888 = vpop.f32.mrf.mxu0
        %v889 = vadd.f32 0.0, %v888
        %890 = vmatprep.mubr.f32.mxu0 0.0
        %891 = vmatmul.mubr.f32.gmra.mxu0 %v809
        %v892 = vpop.f32.mrf.mxu0
        %v893 = vadd.f32 0.0, %v892
        %v894 = vpop.f32.mrf.mxu0
        %v895 = vadd.f32 0.0, %v894
        %896 = vmatprep.mubr.f32.mxu0 0.0
        %897 = vmatmul.mubr.f32.gmra.mxu0 %v812
        %v898 = vpop.f32.mrf.mxu0
        %v899 = vadd.f32 0.0, %v898
        %v900 = vpop.f32.mrf.mxu0
        %v901 = vadd.f32 0.0, %v900
        %902 = vdwg.mxu0
        %903 = vmatprep.subr.mxu0 0.0
        %904 = vmatpush1.msra.mxu0 0.0
        %905 = vmatprep.subr.mxu0 0.0
        %906 = vmatpush1.msra.mxu0 0.0
        %907 = vmatprep.subr.mxu0 0.0
        %908 = vmatpush1.msra.mxu0 0.0
        %909 = vmatprep.subr.mxu0 0.0
        %910 = vmatpush1.msra.mxu0 0.0
        %911 = vmatprep.subr.mxu0 0.0
        %912 = vmatpush1.msra.mxu0 0.0
        %913 = vmatprep.subr.mxu0 0.0
        %914 = vmatpush1.msra.mxu0 0.0
        %915 = vmatprep.subr.mxu0 0.0
        %916 = vmatpush1.msra.mxu0 0.0
        %917 = vmatprep.subr.mxu0 0.0
        %918 = vmatpush1.msra.mxu0 0.0
        %919 = vmatprep.subr.mxu0 %v568
        %920 = vmatpush1.msra.mxu0 %v567
        %921 = vmatprep.subr.mxu0 %v560
        %922 = vmatpush1.msra.mxu0 %v559
        %923 = vmatprep.subr.mxu0 %v552
        %924 = vmatpush1.msra.mxu0 %v551
        %925 = vmatprep.subr.mxu0 %v544
        %926 = vmatpush1.msra.mxu0 %v543
        %927 = vmatprep.subr.mxu0 %v536
        %928 = vmatpush1.msra.mxu0 %v535
        %929 = vmatprep.subr.mxu0 %v528
        %930 = vmatpush1.msra.mxu0 %v527
        %931 = vmatprep.subr.mxu0 %v520
        %932 = vmatpush1.msra.mxu0 %v519
        %933 = vmatprep.subr.mxu0 %v512
        %934 = vmatpush1.msra.mxu0 %v511
        %935 = vmatprep.subr.mxu0 0.0
        %936 = vmatpush2.msra.mxu0 0.0
        %937 = vmatprep.subr.mxu0 0.0
        %938 = vmatpush2.msra.mxu0 0.0
        %939 = vmatprep.subr.mxu0 0.0
        %940 = vmatpush2.msra.mxu0 0.0
        %941 = vmatprep.subr.mxu0 0.0
        %942 = vmatpush2.msra.mxu0 0.0
        %943 = vmatprep.subr.mxu0 0.0
        %944 = vmatpush2.msra.mxu0 0.0
        %945 = vmatprep.subr.mxu0 0.0
        %946 = vmatpush2.msra.mxu0 0.0
        %947 = vmatprep.subr.mxu0 0.0
        %948 = vmatpush2.msra.mxu0 0.0
        %949 = vmatprep.subr.mxu0 0.0
        %950 = vmatpush2.msra.mxu0 0.0
        %951 = vmatprep.subr.mxu0 0.0
        %952 = vmatpush2.msra.mxu0 0.0
        %953 = vmatprep.subr.mxu0 0.0
        %954 = vmatpush2.msra.mxu0 0.0
        %955 = vmatprep.subr.mxu0 0.0
        %956 = vmatpush2.msra.mxu0 0.0
        %957 = vmatprep.subr.mxu0 0.0
        %958 = vmatpush2.msra.mxu0 0.0
        %959 = vmatprep.subr.mxu0 0.0
        %960 = vmatpush2.msra.mxu0 0.0
        %961 = vmatprep.subr.mxu0 0.0
        %962 = vmatpush2.msra.mxu0 0.0
        %963 = vmatprep.subr.mxu0 0.0
        %964 = vmatpush2.msra.mxu0 0.0
        %965 = vmatprep.subr.mxu0 0.0
        %966 = vmatpush2.msra.mxu0 0.0
        %967 = vmatprep.mubr.f32.mxu0 0.0
        %968 = vmatmul.mubr.f32.gmra.mxu0 %v803
        %v969 = vpop.f32.mrf.mxu0
        %v970 = vadd.f32 0.0, %v969
        %v971 = vpop.f32.mrf.mxu0
        %v972 = vadd.f32 0.0, %v971
        %973 = vmatprep.mubr.f32.mxu0 0.0
        %974 = vmatmul.mubr.f32.gmra.mxu0 %v806
        %v975 = vpop.f32.mrf.mxu0
        %v976 = vadd.f32 0.0, %v975
        %v977 = vpop.f32.mrf.mxu0
        %v978 = vadd.f32 0.0, %v977
        %979 = vmatprep.mubr.f32.mxu0 0.0
        %980 = vmatmul.mubr.f32.gmra.mxu0 %v809
        %v981 = vpop.f32.mrf.mxu0
        %v982 = vadd.f32 0.0, %v981
        %v983 = vpop.f32.mrf.mxu0
        %v984 = vadd.f32 0.0, %v983
        %985 = vmatprep.mubr.f32.mxu0 0.0
        %986 = vmatmul.mubr.f32.gmra.mxu0 %v812
        %v987 = vpop.f32.mrf.mxu0
        %v988 = vadd.f32 0.0, %v987
        %v989 = vpop.f32.mrf.mxu0
        %v990 = vadd.f32 0.0, %v989
        %991 = vdwg.mxu0
        %992 = vmatprep.subr.mxu0 0.0
        %993 = vmatpush1.msra.mxu0 0.0
        %994 = vmatprep.subr.mxu0 0.0
        %995 = vmatpush1.msra.mxu0 0.0
        %996 = vmatprep.subr.mxu0 0.0
        %997 = vmatpush1.msra.mxu0 0.0
        %998 = vmatprep.subr.mxu0 0.0
        %999 = vmatpush1.msra.mxu0 0.0
        %1000 = vmatprep.subr.mxu0 0.0
        %1001 = vmatpush1.msra.mxu0 0.0
        %1002 = vmatprep.subr.mxu0 0.0
        %1003 = vmatpush1.msra.mxu0 0.0
        %1004 = vmatprep.subr.mxu0 0.0
        %1005 = vmatpush1.msra.mxu0 0.0
        %1006 = vmatprep.subr.mxu0 0.0
        %1007 = vmatpush1.msra.mxu0 0.0
        %1008 = vmatprep.subr.mxu0 %v570
        %1009 = vmatpush1.msra.mxu0 %v569
        %1010 = vmatprep.subr.mxu0 %v562
        %1011 = vmatpush1.msra.mxu0 %v561
        %1012 = vmatprep.subr.mxu0 %v554
        %1013 = vmatpush1.msra.mxu0 %v553
        %1014 = vmatprep.subr.mxu0 %v546
        %1015 = vmatpush1.msra.mxu0 %v545
        %1016 = vmatprep.subr.mxu0 %v538
        %1017 = vmatpush1.msra.mxu0 %v537
        %1018 = vmatprep.subr.mxu0 %v530
        %1019 = vmatpush1.msra.mxu0 %v529
        %1020 = vmatprep.subr.mxu0 %v522
        %1021 = vmatpush1.msra.mxu0 %v521
        %1022 = vmatprep.subr.mxu0 %v514
        %1023 = vmatpush1.msra.mxu0 %v513
        %1024 = vmatprep.subr.mxu0 0.0
        %1025 = vmatpush2.msra.mxu0 0.0
        %1026 = vmatprep.subr.mxu0 0.0
        %1027 = vmatpush2.msra.mxu0 0.0
        %1028 = vmatprep.subr.mxu0 0.0
        %1029 = vmatpush2.msra.mxu0 0.0
        %1030 = vmatprep.subr.mxu0 0.0
        %1031 = vmatpush2.msra.mxu0 0.0
        %1032 = vmatprep.subr.mxu0 0.0
        %1033 = vmatpush2.msra.mxu0 0.0
        %1034 = vmatprep.subr.mxu0 0.0
        %1035 = vmatpush2.msra.mxu0 0.0
        %1036 = vmatprep.subr.mxu0 0.0
        %1037 = vmatpush2.msra.mxu0 0.0
        %1038 = vmatprep.subr.mxu0 0.0
        %1039 = vmatpush2.msra.mxu0 0.0
        %1040 = vmatprep.subr.mxu0 0.0
        %1041 = vmatpush2.msra.mxu0 0.0
        %1042 = vmatprep.subr.mxu0 0.0
        %1043 = vmatpush2.msra.mxu0 0.0
        %1044 = vmatprep.subr.mxu0 0.0
        %1045 = vmatpush2.msra.mxu0 0.0
        %1046 = vmatprep.subr.mxu0 0.0
        %1047 = vmatpush2.msra.mxu0 0.0
        %1048 = vmatprep.subr.mxu0 0.0
        %1049 = vmatpush2.msra.mxu0 0.0
        %1050 = vmatprep.subr.mxu0 0.0
        %1051 = vmatpush2.msra.mxu0 0.0
        %1052 = vmatprep.subr.mxu0 0.0
        %1053 = vmatpush2.msra.mxu0 0.0
        %1054 = vmatprep.subr.mxu0 0.0
        %1055 = vmatpush2.msra.mxu0 0.0
        %1056 = vmatprep.mubr.f32.mxu0 0.0
        %1057 = vmatmul.mubr.f32.gmra.mxu0 %v803
        %v1058 = vpop.f32.mrf.mxu0
        %v1059 = vadd.f32 0.0, %v1058
        %v1060 = vpop.f32.mrf.mxu0
        %v1061 = vadd.f32 0.0, %v1060
        %1062 = vmatprep.mubr.f32.mxu0 0.0
        %1063 = vmatmul.mubr.f32.gmra.mxu0 %v806
        %v1064 = vpop.f32.mrf.mxu0
        %v1065 = vadd.f32 0.0, %v1064
        %v1066 = vpop.f32.mrf.mxu0
        %v1067 = vadd.f32 0.0, %v1066
        %1068 = vmatprep.mubr.f32.mxu0 0.0
        %1069 = vmatmul.mubr.f32.gmra.mxu0 %v809
        %v1070 = vpop.f32.mrf.mxu0
        %v1071 = vadd.f32 0.0, %v1070
        %v1072 = vpop.f32.mrf.mxu0
        %v1073 = vadd.f32 0.0, %v1072
        %1074 = vmatprep.mubr.f32.mxu0 0.0
        %1075 = vmatmul.mubr.f32.gmra.mxu0 %v812
        %v1076 = vpop.f32.mrf.mxu0
        %v1077 = vadd.f32 0.0, %v1076
        %v1078 = vpop.f32.mrf.mxu0
        %v1079 = vadd.f32 0.0, %v1078
        %1080 = vdwg.mxu0
        %1081 = vmatprep.subr.mxu0 0.0
        %1082 = vmatpush1.msra.mxu0 0.0
        %1083 = vmatprep.subr.mxu0 0.0
        %1084 = vmatpush1.msra.mxu0 0.0
        %1085 = vmatprep.subr.mxu0 0.0
        %1086 = vmatpush1.msra.mxu0 0.0
        %1087 = vmatprep.subr.mxu0 0.0
        %1088 = vmatpush1.msra.mxu0 0.0
        %1089 = vmatprep.subr.mxu0 0.0
        %1090 = vmatpush1.msra.mxu0 0.0
        %1091 = vmatprep.subr.mxu0 0.0
        %1092 = vmatpush1.msra.mxu0 0.0
        %1093 = vmatprep.subr.mxu0 0.0
        %1094 = vmatpush1.msra.mxu0 0.0
        %1095 = vmatprep.subr.mxu0 0.0
        %1096 = vmatpush1.msra.mxu0 0.0
        %1097 = vmatprep.subr.mxu0 %v572
        %1098 = vmatpush1.msra.mxu0 %v571
        %1099 = vmatprep.subr.mxu0 %v564
        %1100 = vmatpush1.msra.mxu0 %v563
        %1101 = vmatprep.subr.mxu0 %v556
        %1102 = vmatpush1.msra.mxu0 %v555
        %1103 = vmatprep.subr.mxu0 %v548
        %1104 = vmatpush1.msra.mxu0 %v547
        %1105 = vmatprep.subr.mxu0 %v540
        %1106 = vmatpush1.msra.mxu0 %v539
        %1107 = vmatprep.subr.mxu0 %v532
        %1108 = vmatpush1.msra.mxu0 %v531
        %1109 = vmatprep.subr.mxu0 %v524
        %1110 = vmatpush1.msra.mxu0 %v523
        %1111 = vmatprep.subr.mxu0 %v516
        %1112 = vmatpush1.msra.mxu0 %v515
        %1113 = vmatprep.subr.mxu0 0.0
        %1114 = vmatpush2.msra.mxu0 0.0
        %1115 = vmatprep.subr.mxu0 0.0
        %1116 = vmatpush2.msra.mxu0 0.0
        %1117 = vmatprep.subr.mxu0 0.0
        %1118 = vmatpush2.msra.mxu0 0.0
        %1119 = vmatprep.subr.mxu0 0.0
        %1120 = vmatpush2.msra.mxu0 0.0
        %1121 = vmatprep.subr.mxu0 0.0
        %1122 = vmatpush2.msra.mxu0 0.0
        %1123 = vmatprep.subr.mxu0 0.0
        %1124 = vmatpush2.msra.mxu0 0.0
        %1125 = vmatprep.subr.mxu0 0.0
        %1126 = vmatpush2.msra.mxu0 0.0
        %1127 = vmatprep.subr.mxu0 0.0
        %1128 = vmatpush2.msra.mxu0 0.0
        %1129 = vmatprep.subr.mxu0 0.0
        %1130 = vmatpush2.msra.mxu0 0.0
        %1131 = vmatprep.subr.mxu0 0.0
        %1132 = vmatpush2.msra.mxu0 0.0
        %1133 = vmatprep.subr.mxu0 0.0
        %1134 = vmatpush2.msra.mxu0 0.0
        %1135 = vmatprep.subr.mxu0 0.0
        %1136 = vmatpush2.msra.mxu0 0.0
        %1137 = vmatprep.subr.mxu0 0.0
        %1138 = vmatpush2.msra.mxu0 0.0
        %1139 = vmatprep.subr.mxu0 0.0
        %1140 = vmatpush2.msra.mxu0 0.0
        %1141 = vmatprep.subr.mxu0 0.0
        %1142 = vmatpush2.msra.mxu0 0.0
        %1143 = vmatprep.subr.mxu0 0.0
        %1144 = vmatpush2.msra.mxu0 0.0
        %1145 = vmatprep.mubr.f32.mxu0 0.0
        %1146 = vmatmul.mubr.f32.gmra.mxu0 %v803
        %v1147 = vpop.f32.mrf.mxu0
        %v1148 = vadd.f32 0.0, %v1147
        %v1149 = vpop.f32.mrf.mxu0
        %v1150 = vadd.f32 0.0, %v1149
        %1151 = vmatprep.mubr.f32.mxu0 0.0
        %1152 = vmatmul.mubr.f32.gmra.mxu0 %v806
        %v1153 = vpop.f32.mrf.mxu0
        %v1154 = vadd.f32 0.0, %v1153
        %v1155 = vpop.f32.mrf.mxu0
        %v1156 = vadd.f32 0.0, %v1155
        %1157 = vmatprep.mubr.f32.mxu0 0.0
        %1158 = vmatmul.mubr.f32.gmra.mxu0 %v809
        %v1159 = vpop.f32.mrf.mxu0
        %v1160 = vadd.f32 0.0, %v1159
        %v1161 = vpop.f32.mrf.mxu0
        %v1162 = vadd.f32 0.0, %v1161
        %1163 = vmatprep.mubr.f32.mxu0 0.0
        %1164 = vmatmul.mubr.f32.gmra.mxu0 %v812
        %v1165 = vpop.f32.mrf.mxu0
        %v1166 = vadd.f32 0.0, %v1165
        %v1167 = vpop.f32.mrf.mxu0
        %v1168 = vadd.f32 0.0, %v1167
        %1169 = vdwg.mxu0
        %v1170 = vld [vmem:[#allocation5] sm:$0xff]
        %v1171 = vld [vmem:[#allocation5 + $0x8] sm:$0xff]
        %v1172 = vld [vmem:[#allocation5 + $0x10] sm:$0xff]
        %v1173 = vld [vmem:[#allocation5 + $0x18] sm:$0xff]
        %v1175 = vsel %vm801, %v1170, 0
        %v1178 = vsel %vm801, %v1171, 0
        %v1181 = vsel %vm801, %v1172, 0
        %v1184 = vsel %vm801, %v1173, 0
        %1186 = vmatprep.subr.mxu0 0.0
        %1187 = vmatpush1.msra.mxu0 0.0
        %1188 = vmatprep.subr.mxu0 0.0
        %1189 = vmatpush1.msra.mxu0 0.0
        %1190 = vmatprep.subr.mxu0 0.0
        %1191 = vmatpush1.msra.mxu0 0.0
        %1192 = vmatprep.subr.mxu0 0.0
        %1193 = vmatpush1.msra.mxu0 0.0
        %1194 = vmatprep.subr.mxu0 0.0
        %1195 = vmatpush1.msra.mxu0 0.0
        %1196 = vmatprep.subr.mxu0 0.0
        %1197 = vmatpush1.msra.mxu0 0.0
        %1198 = vmatprep.subr.mxu0 0.0
        %1199 = vmatpush1.msra.mxu0 0.0
        %1200 = vmatprep.subr.mxu0 0.0
        %1201 = vmatpush1.msra.mxu0 0.0
        %1202 = vmatprep.subr.mxu0 %v790
        %1203 = vmatpush1.msra.mxu0 %v789
        %1204 = vmatprep.subr.mxu0 %v782
        %1205 = vmatpush1.msra.mxu0 %v781
        %1206 = vmatprep.subr.mxu0 %v774
        %1207 = vmatpush1.msra.mxu0 %v773
        %1208 = vmatprep.subr.mxu0 %v766
        %1209 = vmatpush1.msra.mxu0 %v765
        %1210 = vmatprep.subr.mxu0 %v758
        %1211 = vmatpush1.msra.mxu0 %v757
        %1212 = vmatprep.subr.mxu0 %v750
        %1213 = vmatpush1.msra.mxu0 %v749
        %1214 = vmatprep.subr.mxu0 %v742
        %1215 = vmatpush1.msra.mxu0 %v741
        %1216 = vmatprep.subr.mxu0 %v734
        %1217 = vmatpush1.msra.mxu0 %v733
        %1218 = vmatprep.subr.mxu0 0.0
        %1219 = vmatpush2.msra.mxu0 0.0
        %1220 = vmatprep.subr.mxu0 0.0
        %1221 = vmatpush2.msra.mxu0 0.0
        %1222 = vmatprep.subr.mxu0 0.0
        %1223 = vmatpush2.msra.mxu0 0.0
        %1224 = vmatprep.subr.mxu0 0.0
        %1225 = vmatpush2.msra.mxu0 0.0
        %1226 = vmatprep.subr.mxu0 0.0
        %1227 = vmatpush2.msra.mxu0 0.0
        %1228 = vmatprep.subr.mxu0 0.0
        %1229 = vmatpush2.msra.mxu0 0.0
        %1230 = vmatprep.subr.mxu0 0.0
        %1231 = vmatpush2.msra.mxu0 0.0
        %1232 = vmatprep.subr.mxu0 0.0
        %1233 = vmatpush2.msra.mxu0 0.0
        %1234 = vmatprep.subr.mxu0 0.0
        %1235 = vmatpush2.msra.mxu0 0.0
        %1236 = vmatprep.subr.mxu0 0.0
        %1237 = vmatpush2.msra.mxu0 0.0
        %1238 = vmatprep.subr.mxu0 0.0
        %1239 = vmatpush2.msra.mxu0 0.0
        %1240 = vmatprep.subr.mxu0 0.0
        %1241 = vmatpush2.msra.mxu0 0.0
        %1242 = vmatprep.subr.mxu0 0.0
        %1243 = vmatpush2.msra.mxu0 0.0
        %1244 = vmatprep.subr.mxu0 0.0
        %1245 = vmatpush2.msra.mxu0 0.0
        %1246 = vmatprep.subr.mxu0 0.0
        %1247 = vmatpush2.msra.mxu0 0.0
        %1248 = vmatprep.subr.mxu0 0.0
        %1249 = vmatpush2.msra.mxu0 0.0
        %1250 = vmatprep.mubr.f32.mxu0 0.0
        %1251 = vmatmul.mubr.f32.gmra.mxu0 %v1175
        %v1252 = vpop.f32.mrf.mxu0
        %v1253 = vadd.f32 0.0, %v1252
        %v1254 = vpop.f32.mrf.mxu0
        %v1255 = vadd.f32 0.0, %v1254
        %1256 = vmatprep.mubr.f32.mxu0 0.0
        %1257 = vmatmul.mubr.f32.gmra.mxu0 %v1178
        %v1258 = vpop.f32.mrf.mxu0
        %v1259 = vadd.f32 0.0, %v1258
        %v1260 = vpop.f32.mrf.mxu0
        %v1261 = vadd.f32 0.0, %v1260
        %1262 = vmatprep.mubr.f32.mxu0 0.0
        %1263 = vmatmul.mubr.f32.gmra.mxu0 %v1181
        %v1264 = vpop.f32.mrf.mxu0
        %v1265 = vadd.f32 0.0, %v1264
        %v1266 = vpop.f32.mrf.mxu0
        %v1267 = vadd.f32 0.0, %v1266
        %1268 = vmatprep.mubr.f32.mxu0 0.0
        %1269 = vmatmul.mubr.f32.gmra.mxu0 %v1184
        %v1270 = vpop.f32.mrf.mxu0
        %v1271 = vadd.f32 0.0, %v1270
        %v1272 = vpop.f32.mrf.mxu0
        %v1273 = vadd.f32 0.0, %v1272
        %1274 = vdwg.mxu0
        %1275 = vmatprep.subr.mxu0 0.0
        %1276 = vmatpush1.msra.mxu0 0.0
        %1277 = vmatprep.subr.mxu0 0.0
        %1278 = vmatpush1.msra.mxu0 0.0
        %1279 = vmatprep.subr.mxu0 0.0
        %1280 = vmatpush1.msra.mxu0 0.0
        %1281 = vmatprep.subr.mxu0 0.0
        %1282 = vmatpush1.msra.mxu0 0.0
        %1283 = vmatprep.subr.mxu0 0.0
        %1284 = vmatpush1.msra.mxu0 0.0
        %1285 = vmatprep.subr.mxu0 0.0
        %1286 = vmatpush1.msra.mxu0 0.0
        %1287 = vmatprep.subr.mxu0 0.0
        %1288 = vmatpush1.msra.mxu0 0.0
        %1289 = vmatprep.subr.mxu0 0.0
        %1290 = vmatpush1.msra.mxu0 0.0
        %1291 = vmatprep.subr.mxu0 %v792
        %1292 = vmatpush1.msra.mxu0 %v791
        %1293 = vmatprep.subr.mxu0 %v784
        %1294 = vmatpush1.msra.mxu0 %v783
        %1295 = vmatprep.subr.mxu0 %v776
        %1296 = vmatpush1.msra.mxu0 %v775
        %1297 = vmatprep.subr.mxu0 %v768
        %1298 = vmatpush1.msra.mxu0 %v767
        %1299 = vmatprep.subr.mxu0 %v760
        %1300 = vmatpush1.msra.mxu0 %v759
        %1301 = vmatprep.subr.mxu0 %v752
        %1302 = vmatpush1.msra.mxu0 %v751
        %1303 = vmatprep.subr.mxu0 %v744
        %1304 = vmatpush1.msra.mxu0 %v743
        %1305 = vmatprep.subr.mxu0 %v736
        %1306 = vmatpush1.msra.mxu0 %v735
        %1307 = vmatprep.subr.mxu0 0.0
        %1308 = vmatpush2.msra.mxu0 0.0
        %1309 = vmatprep.subr.mxu0 0.0
        %1310 = vmatpush2.msra.mxu0 0.0
        %1311 = vmatprep.subr.mxu0 0.0
        %1312 = vmatpush2.msra.mxu0 0.0
        %1313 = vmatprep.subr.mxu0 0.0
        %1314 = vmatpush2.msra.mxu0 0.0
        %1315 = vmatprep.subr.mxu0 0.0
        %1316 = vmatpush2.msra.mxu0 0.0
        %1317 = vmatprep.subr.mxu0 0.0
        %1318 = vmatpush2.msra.mxu0 0.0
        %1319 = vmatprep.subr.mxu0 0.0
        %1320 = vmatpush2.msra.mxu0 0.0
        %1321 = vmatprep.subr.mxu0 0.0
        %1322 = vmatpush2.msra.mxu0 0.0
        %1323 = vmatprep.subr.mxu0 0.0
        %1324 = vmatpush2.msra.mxu0 0.0
        %1325 = vmatprep.subr.mxu0 0.0
        %1326 = vmatpush2.msra.mxu0 0.0
        %1327 = vmatprep.subr.mxu0 0.0
        %1328 = vmatpush2.msra.mxu0 0.0
        %1329 = vmatprep.subr.mxu0 0.0
        %1330 = vmatpush2.msra.mxu0 0.0
        %1331 = vmatprep.subr.mxu0 0.0
        %1332 = vmatpush2.msra.mxu0 0.0
        %1333 = vmatprep.subr.mxu0 0.0
        %1334 = vmatpush2.msra.mxu0 0.0
        %1335 = vmatprep.subr.mxu0 0.0
        %1336 = vmatpush2.msra.mxu0 0.0
        %1337 = vmatprep.subr.mxu0 0.0
        %1338 = vmatpush2.msra.mxu0 0.0
        %1339 = vmatprep.mubr.f32.mxu0 0.0
        %1340 = vmatmul.mubr.f32.gmra.mxu0 %v1175
        %v1341 = vpop.f32.mrf.mxu0
        %v1342 = vadd.f32 0.0, %v1341
        %v1343 = vpop.f32.mrf.mxu0
        %v1344 = vadd.f32 0.0, %v1343
        %1345 = vmatprep.mubr.f32.mxu0 0.0
        %1346 = vmatmul.mubr.f32.gmra.mxu0 %v1178
        %v1347 = vpop.f32.mrf.mxu0
        %v1348 = vadd.f32 0.0, %v1347
        %v1349 = vpop.f32.mrf.mxu0
        %v1350 = vadd.f32 0.0, %v1349
        %1351 = vmatprep.mubr.f32.mxu0 0.0
        %1352 = vmatmul.mubr.f32.gmra.mxu0 %v1181
        %v1353 = vpop.f32.mrf.mxu0
        %v1354 = vadd.f32 0.0, %v1353
        %v1355 = vpop.f32.mrf.mxu0
        %v1356 = vadd.f32 0.0, %v1355
        %1357 = vmatprep.mubr.f32.mxu0 0.0
        %1358 = vmatmul.mubr.f32.gmra.mxu0 %v1184
        %v1359 = vpop.f32.mrf.mxu0
        %v1360 = vadd.f32 0.0, %v1359
        %v1361 = vpop.f32.mrf.mxu0
        %v1362 = vadd.f32 0.0, %v1361
        %1363 = vdwg.mxu0
        %1364 = vmatprep.subr.mxu0 0.0
        %1365 = vmatpush1.msra.mxu0 0.0
        %1366 = vmatprep.subr.mxu0 0.0
        %1367 = vmatpush1.msra.mxu0 0.0
        %1368 = vmatprep.subr.mxu0 0.0
        %1369 = vmatpush1.msra.mxu0 0.0
        %1370 = vmatprep.subr.mxu0 0.0
        %1371 = vmatpush1.msra.mxu0 0.0
        %1372 = vmatprep.subr.mxu0 0.0
        %1373 = vmatpush1.msra.mxu0 0.0
        %1374 = vmatprep.subr.mxu0 0.0
        %1375 = vmatpush1.msra.mxu0 0.0
        %1376 = vmatprep.subr.mxu0 0.0
        %1377 = vmatpush1.msra.mxu0 0.0
        %1378 = vmatprep.subr.mxu0 0.0
        %1379 = vmatpush1.msra.mxu0 0.0
        %1380 = vmatprep.subr.mxu0 %v794
        %1381 = vmatpush1.msra.mxu0 %v793
        %1382 = vmatprep.subr.mxu0 %v786
        %1383 = vmatpush1.msra.mxu0 %v785
        %1384 = vmatprep.subr.mxu0 %v778
        %1385 = vmatpush1.msra.mxu0 %v777
        %1386 = vmatprep.subr.mxu0 %v770
        %1387 = vmatpush1.msra.mxu0 %v769
        %1388 = vmatprep.subr.mxu0 %v762
        %1389 = vmatpush1.msra.mxu0 %v761
        %1390 = vmatprep.subr.mxu0 %v754
        %1391 = vmatpush1.msra.mxu0 %v753
        %1392 = vmatprep.subr.mxu0 %v746
        %1393 = vmatpush1.msra.mxu0 %v745
        %1394 = vmatprep.subr.mxu0 %v738
        %1395 = vmatpush1.msra.mxu0 %v737
        %1396 = vmatprep.subr.mxu0 0.0
        %1397 = vmatpush2.msra.mxu0 0.0
        %1398 = vmatprep.subr.mxu0 0.0
        %1399 = vmatpush2.msra.mxu0 0.0
        %1400 = vmatprep.subr.mxu0 0.0
        %1401 = vmatpush2.msra.mxu0 0.0
        %1402 = vmatprep.subr.mxu0 0.0
        %1403 = vmatpush2.msra.mxu0 0.0
        %1404 = vmatprep.subr.mxu0 0.0
        %1405 = vmatpush2.msra.mxu0 0.0
        %1406 = vmatprep.subr.mxu0 0.0
        %1407 = vmatpush2.msra.mxu0 0.0
        %1408 = vmatprep.subr.mxu0 0.0
        %1409 = vmatpush2.msra.mxu0 0.0
        %1410 = vmatprep.subr.mxu0 0.0
        %1411 = vmatpush2.msra.mxu0 0.0
        %1412 = vmatprep.subr.mxu0 0.0
        %1413 = vmatpush2.msra.mxu0 0.0
        %1414 = vmatprep.subr.mxu0 0.0
        %1415 = vmatpush2.msra.mxu0 0.0
        %1416 = vmatprep.subr.mxu0 0.0
        %1417 = vmatpush2.msra.mxu0 0.0
        %1418 = vmatprep.subr.mxu0 0.0
        %1419 = vmatpush2.msra.mxu0 0.0
        %1420 = vmatprep.subr.mxu0 0.0
        %1421 = vmatpush2.msra.mxu0 0.0
        %1422 = vmatprep.subr.mxu0 0.0
        %1423 = vmatpush2.msra.mxu0 0.0
        %1424 = vmatprep.subr.mxu0 0.0
        %1425 = vmatpush2.msra.mxu0 0.0
        %1426 = vmatprep.subr.mxu0 0.0
        %1427 = vmatpush2.msra.mxu0 0.0
        %1428 = vmatprep.mubr.f32.mxu0 0.0
        %1429 = vmatmul.mubr.f32.gmra.mxu0 %v1175
        %v1430 = vpop.f32.mrf.mxu0
        %v1431 = vadd.f32 0.0, %v1430
        %v1432 = vpop.f32.mrf.mxu0
        %v1433 = vadd.f32 0.0, %v1432
        %1434 = vmatprep.mubr.f32.mxu0 0.0
        %1435 = vmatmul.mubr.f32.gmra.mxu0 %v1178
        %v1436 = vpop.f32.mrf.mxu0
        %v1437 = vadd.f32 0.0, %v1436
        %v1438 = vpop.f32.mrf.mxu0
        %v1439 = vadd.f32 0.0, %v1438
        %1440 = vmatprep.mubr.f32.mxu0 0.0
        %1441 = vmatmul.mubr.f32.gmra.mxu0 %v1181
        %v1442 = vpop.f32.mrf.mxu0
        %v1443 = vadd.f32 0.0, %v1442
        %v1444 = vpop.f32.mrf.mxu0
        %v1445 = vadd.f32 0.0, %v1444
        %1446 = vmatprep.mubr.f32.mxu0 0.0
        %1447 = vmatmul.mubr.f32.gmra.mxu0 %v1184
        %v1448 = vpop.f32.mrf.mxu0
        %v1449 = vadd.f32 0.0, %v1448
        %v1450 = vpop.f32.mrf.mxu0
        %v1451 = vadd.f32 0.0, %v1450
        %1452 = vdwg.mxu0
        %1453 = vmatprep.subr.mxu0 0.0
        %1454 = vmatpush1.msra.mxu0 0.0
        %1455 = vmatprep.subr.mxu0 0.0
        %1456 = vmatpush1.msra.mxu0 0.0
        %1457 = vmatprep.subr.mxu0 0.0
        %1458 = vmatpush1.msra.mxu0 0.0
        %1459 = vmatprep.subr.mxu0 0.0
        %1460 = vmatpush1.msra.mxu0 0.0
        %1461 = vmatprep.subr.mxu0 0.0
        %1462 = vmatpush1.msra.mxu0 0.0
        %1463 = vmatprep.subr.mxu0 0.0
        %1464 = vmatpush1.msra.mxu0 0.0
        %1465 = vmatprep.subr.mxu0 0.0
        %1466 = vmatpush1.msra.mxu0 0.0
        %1467 = vmatprep.subr.mxu0 0.0
        %1468 = vmatpush1.msra.mxu0 0.0
        %1469 = vmatprep.subr.mxu0 %v796
        %1470 = vmatpush1.msra.mxu0 %v795
        %1471 = vmatprep.subr.mxu0 %v788
        %1472 = vmatpush1.msra.mxu0 %v787
        %1473 = vmatprep.subr.mxu0 %v780
        %1474 = vmatpush1.msra.mxu0 %v779
        %1475 = vmatprep.subr.mxu0 %v772
        %1476 = vmatpush1.msra.mxu0 %v771
        %1477 = vmatprep.subr.mxu0 %v764
        %1478 = vmatpush1.msra.mxu0 %v763
        %1479 = vmatprep.subr.mxu0 %v756
        %1480 = vmatpush1.msra.mxu0 %v755
        %1481 = vmatprep.subr.mxu0 %v748
        %1482 = vmatpush1.msra.mxu0 %v747
        %1483 = vmatprep.subr.mxu0 %v740
        %1484 = vmatpush1.msra.mxu0 %v739
        %1485 = vmatprep.subr.mxu0 0.0
        %1486 = vmatpush2.msra.mxu0 0.0
        %1487 = vmatprep.subr.mxu0 0.0
        %1488 = vmatpush2.msra.mxu0 0.0
        %1489 = vmatprep.subr.mxu0 0.0
        %1490 = vmatpush2.msra.mxu0 0.0
        %1491 = vmatprep.subr.mxu0 0.0
        %1492 = vmatpush2.msra.mxu0 0.0
        %1493 = vmatprep.subr.mxu0 0.0
        %1494 = vmatpush2.msra.mxu0 0.0
        %1495 = vmatprep.subr.mxu0 0.0
        %1496 = vmatpush2.msra.mxu0 0.0
        %1497 = vmatprep.subr.mxu0 0.0
        %1498 = vmatpush2.msra.mxu0 0.0
        %1499 = vmatprep.subr.mxu0 0.0
        %1500 = vmatpush2.msra.mxu0 0.0
        %1501 = vmatprep.subr.mxu0 0.0
        %1502 = vmatpush2.msra.mxu0 0.0
        %1503 = vmatprep.subr.mxu0 0.0
        %1504 = vmatpush2.msra.mxu0 0.0
        %1505 = vmatprep.subr.mxu0 0.0
        %1506 = vmatpush2.msra.mxu0 0.0
        %1507 = vmatprep.subr.mxu0 0.0
        %1508 = vmatpush2.msra.mxu0 0.0
        %1509 = vmatprep.subr.mxu0 0.0
        %1510 = vmatpush2.msra.mxu0 0.0
        %1511 = vmatprep.subr.mxu0 0.0
        %1512 = vmatpush2.msra.mxu0 0.0
        %1513 = vmatprep.subr.mxu0 0.0
        %1514 = vmatpush2.msra.mxu0 0.0
        %1515 = vmatprep.subr.mxu0 0.0
        %1516 = vmatpush2.msra.mxu0 0.0
        %1517 = vmatprep.mubr.f32.mxu0 0.0
        %1518 = vmatmul.mubr.f32.gmra.mxu0 %v1175
        %v1519 = vpop.f32.mrf.mxu0
        %v1520 = vadd.f32 0.0, %v1519
        %v1521 = vpop.f32.mrf.mxu0
        %v1522 = vadd.f32 0.0, %v1521
        %1523 = vmatprep.mubr.f32.mxu0 0.0
        %1524 = vmatmul.mubr.f32.gmra.mxu0 %v1178
        %v1525 = vpop.f32.mrf.mxu0
        %v1526 = vadd.f32 0.0, %v1525
        %v1527 = vpop.f32.mrf.mxu0
        %v1528 = vadd.f32 0.0, %v1527
        %1529 = vmatprep.mubr.f32.mxu0 0.0
        %1530 = vmatmul.mubr.f32.gmra.mxu0 %v1181
        %v1531 = vpop.f32.mrf.mxu0
        %v1532 = vadd.f32 0.0, %v1531
        %v1533 = vpop.f32.mrf.mxu0
        %v1534 = vadd.f32 0.0, %v1533
        %1535 = vmatprep.mubr.f32.mxu0 0.0
        %1536 = vmatmul.mubr.f32.gmra.mxu0 %v1184
        %v1537 = vpop.f32.mrf.mxu0
        %v1538 = vadd.f32 0.0, %v1537
        %v1539 = vpop.f32.mrf.mxu0
        %v1540 = vadd.f32 0.0, %v1539
        %1541 = vdwg.mxu0
        %v1542 = vmul.f32 %v881, %v1253
        %v1543 = vmul.f32 %v883, %v1255
        %v1544 = vmul.f32 %v970, %v1342
        %v1545 = vmul.f32 %v972, %v1344
        %v1546 = vmul.f32 %v1059, %v1431
        %v1547 = vmul.f32 %v1061, %v1433
        %v1548 = vmul.f32 %v1148, %v1520
        %v1549 = vmul.f32 %v1150, %v1522
        %v1550 = vmul.f32 %v887, %v1259
        %v1551 = vmul.f32 %v889, %v1261
        %v1552 = vmul.f32 %v976, %v1348
        %v1553 = vmul.f32 %v978, %v1350
        %v1554 = vmul.f32 %v1065, %v1437
        %v1555 = vmul.f32 %v1067, %v1439
        %v1556 = vmul.f32 %v1154, %v1526
        %v1557 = vmul.f32 %v1156, %v1528
        %v1558 = vmul.f32 %v893, %v1265
        %v1559 = vmul.f32 %v895, %v1267
        %v1560 = vmul.f32 %v982, %v1354
        %v1561 = vmul.f32 %v984, %v1356
        %v1562 = vmul.f32 %v1071, %v1443
        %v1563 = vmul.f32 %v1073, %v1445
        %v1564 = vmul.f32 %v1160, %v1532
        %v1565 = vmul.f32 %v1162, %v1534
        %v1566 = vmul.f32 %v899, %v1271
        %v1567 = vmul.f32 %v901, %v1273
        %v1568 = vmul.f32 %v988, %v1360
        %v1569 = vmul.f32 %v990, %v1362
        %v1570 = vmul.f32 %v1077, %v1449
        %v1571 = vmul.f32 %v1079, %v1451
        %v1572 = vmul.f32 %v1166, %v1538
        %v1573 = vmul.f32 %v1168, %v1540
        %v1574 = vadd.f32 %v1542, %v1550
        %v1575 = vadd.f32 %v1574, %v1558
        %v1576 = vadd.f32 %v1575, %v1566
        %v1577 = vrot.slane %v1576, 4
        %v1578 = vadd.f32 %v1576, %v1577
        %v1579 = vrot.slane %v1578, 2
        %v1580 = vadd.f32 %v1578, %v1579
        %v1581 = vrot.slane %v1580, 1
        %v1582 = vadd.f32 %v1580, %v1581
        %v1583 = vadd.f32 %v1543, %v1551
        %v1584 = vadd.f32 %v1583, %v1559
        %v1585 = vadd.f32 %v1584, %v1567
        %v1586 = vrot.slane %v1585, 4
        %v1587 = vadd.f32 %v1585, %v1586
        %v1588 = vrot.slane %v1587, 2
        %v1589 = vadd.f32 %v1587, %v1588
        %v1590 = vrot.slane %v1589, 1
        %v1591 = vadd.f32 %v1589, %v1590
        %v1592 = vadd.f32 %v1544, %v1552
        %v1593 = vadd.f32 %v1592, %v1560
        %v1594 = vadd.f32 %v1593, %v1568
        %v1595 = vrot.slane %v1594, 4
        %v1596 = vadd.f32 %v1594, %v1595
        %v1597 = vrot.slane %v1596, 2
        %v1598 = vadd.f32 %v1596, %v1597
        %v1599 = vrot.slane %v1598, 1
        %v1600 = vadd.f32 %v1598, %v1599
        %v1601 = vadd.f32 %v1545, %v1553
        %v1602 = vadd.f32 %v1601, %v1561
        %v1603 = vadd.f32 %v1602, %v1569
        %v1604 = vrot.slane %v1603, 4
        %v1605 = vadd.f32 %v1603, %v1604
        %v1606 = vrot.slane %v1605, 2
        %v1607 = vadd.f32 %v1605, %v1606
        %v1608 = vrot.slane %v1607, 1
        %v1609 = vadd.f32 %v1607, %v1608
        %v1610 = vadd.f32 %v1546, %v1554
        %v1611 = vadd.f32 %v1610, %v1562
        %v1612 = vadd.f32 %v1611, %v1570
        %v1613 = vrot.slane %v1612, 4
        %v1614 = vadd.f32 %v1612, %v1613
        %v1615 = vrot.slane %v1614, 2
        %v1616 = vadd.f32 %v1614, %v1615
        %v1617 = vrot.slane %v1616, 1
        %v1618 = vadd.f32 %v1616, %v1617
        %v1619 = vadd.f32 %v1547, %v1555
        %v1620 = vadd.f32 %v1619, %v1563
        %v1621 = vadd.f32 %v1620, %v1571
        %v1622 = vrot.slane %v1621, 4
        %v1623 = vadd.f32 %v1621, %v1622
        %v1624 = vrot.slane %v1623, 2
        %v1625 = vadd.f32 %v1623, %v1624
        %v1626 = vrot.slane %v1625, 1
        %v1627 = vadd.f32 %v1625, %v1626
        %v1628 = vadd.f32 %v1548, %v1556
        %v1629 = vadd.f32 %v1628, %v1564
        %v1630 = vadd.f32 %v1629, %v1572
        %v1631 = vrot.slane %v1630, 4
        %v1632 = vadd.f32 %v1630, %v1631
        %v1633 = vrot.slane %v1632, 2
        %v1634 = vadd.f32 %v1632, %v1633
        %v1635 = vrot.slane %v1634, 1
        %v1636 = vadd.f32 %v1634, %v1635
        %v1637 = vadd.f32 %v1549, %v1557
        %v1638 = vadd.f32 %v1637, %v1565
        %v1639 = vadd.f32 %v1638, %v1573
        %v1640 = vrot.slane %v1639, 4
        %v1641 = vadd.f32 %v1639, %v1640
        %v1642 = vrot.slane %v1641, 2
        %v1643 = vadd.f32 %v1641, %v1642
        %v1644 = vrot.slane %v1643, 1
        %v1645 = vadd.f32 %v1643, %v1644
        %v1646 = vld [vmem:[%s301] sm:$0xff]
        %v1648 = vlaneseq
        %v1649 = vshrl.u32 %v1648, 7
        %v1650 = vsub.s32 0, %v1649
        %v1651 = vrot.slane %v1646, %v1650
        %v1652 = vlaneseq
        %v1653 = vshrl.u32 %v1652, 7
        %v1654 = vsub.s32 1, %v1653
        %v1655 = vrot.slane %v1646, %v1654
        %v1656 = vlaneseq
        %v1657 = vshrl.u32 %v1656, 7
        %v1658 = vsub.s32 2, %v1657
        %v1659 = vrot.slane %v1646, %v1658
        %v1660 = vlaneseq
        %v1661 = vshrl.u32 %v1660, 7
        %v1662 = vsub.s32 3, %v1661
        %v1663 = vrot.slane %v1646, %v1662
        %v1664 = vlaneseq
        %v1665 = vshrl.u32 %v1664, 7
        %v1666 = vsub.s32 4, %v1665
        %v1667 = vrot.slane %v1646, %v1666
        %v1668 = vlaneseq
        %v1669 = vshrl.u32 %v1668, 7
        %v1670 = vsub.s32 5, %v1669
        %v1671 = vrot.slane %v1646, %v1670
        %v1672 = vlaneseq
        %v1673 = vshrl.u32 %v1672, 7
        %v1674 = vsub.s32 6, %v1673
        %v1675 = vrot.slane %v1646, %v1674
        %v1676 = vlaneseq
        %v1677 = vshrl.u32 %v1676, 7
        %v1678 = vsub.s32 7, %v1677
        %v1679 = vrot.slane %v1646, %v1678
        %v1688 = vadd.f32 %v1582, %v1651
        %v1689 = vadd.f32 %v1591, %v1655
        %v1690 = vadd.f32 %v1600, %v1659
        %v1691 = vadd.f32 %v1609, %v1663
        %v1692 = vadd.f32 %v1618, %v1667
        %v1693 = vadd.f32 %v1627, %v1671
        %v1694 = vadd.f32 %v1636, %v1675
        %v1695 = vadd.f32 %v1645, %v1679
        %v1696 = vmax.f32 %v1688, 1.0
        %v1697 = vmax.f32 %v1689, 1.0
        %v1698 = vmax.f32 %v1690, 1.0
        %v1699 = vmax.f32 %v1691, 1.0
        %v1700 = vmax.f32 %v1692, 1.0
        %v1701 = vmax.f32 %v1693, 1.0
        %v1702 = vmax.f32 %v1694, 1.0
        %v1703 = vmax.f32 %v1695, 1.0
        %v1704 = vmin.f32 %v1696, 5.0
        %v1705 = vmin.f32 %v1697, 5.0
        %v1706 = vmin.f32 %v1698, 5.0
        %v1707 = vmin.f32 %v1699, 5.0
        %v1708 = vmin.f32 %v1700, 5.0
        %v1709 = vmin.f32 %v1701, 5.0
        %v1710 = vmin.f32 %v1702, 5.0
        %v1711 = vmin.f32 %v1703, 5.0
        %v1720 = vcombine.low %v1704, %v1705
        %v1721 = vcombine.low %v1706, %v1707
        %v1722 = vcombine.low %v1708, %v1709
        %v1723 = vcombine.low %v1710, %v1711
        %v1725 = vunpack.c.l.s4 1966171168
        %v1726 = vunpack.c.0.s8 %v1725
        %v1727 = vlaneseq
        %v1728 = vshrl.u32 %v1727, 7
        %v1729 = vsub.s32 %v1726, %v1728
        %v1730 = vrot.slane %v1720, %v1729
        %v1732 = vunpack.c.l.s4 1966171168
        %v1733 = vunpack.c.0.s8 %v1732
        %v1734 = vlaneseq
        %v1735 = vshrl.u32 %v1734, 7
        %v1736 = vsub.s32 %v1733, %v1735
        %v1737 = vrot.slane %v1721, %v1736
        %v1739 = vunpack.c.l.s4 1966171168
        %v1740 = vunpack.c.0.s8 %v1739
        %v1741 = vlaneseq
        %v1742 = vshrl.u32 %v1741, 7
        %v1743 = vsub.s32 %v1740, %v1742
        %v1744 = vrot.slane %v1722, %v1743
        %v1746 = vunpack.c.l.s4 1966171168
        %v1747 = vunpack.c.0.s8 %v1746
        %v1748 = vlaneseq
        %v1749 = vshrl.u32 %v1748, 7
        %v1750 = vsub.s32 %v1747, %v1749
        %v1751 = vrot.slane %v1723, %v1750
        %v1752 = vcombine.low %v1730, %v1737
        %v1753 = vcombine.low %v1744, %v1751
        %v1755 = vunpack.c.l.s4 1966171168
        %v1756 = vunpack.c.0.s8 %v1755
        %v1757 = vlaneseq
        %v1758 = vshrl.u32 %v1757, 7
        %v1759 = vsub.s32 %v1756, %v1758
        %v1760 = vrot.slane %v1752, %v1759
        %v1762 = vunpack.c.l.s4 1966171168
        %v1763 = vunpack.c.0.s8 %v1762
        %v1764 = vlaneseq
        %v1765 = vshrl.u32 %v1764, 7
        %v1766 = vsub.s32 %v1763, %v1765
        %v1767 = vrot.slane %v1753, %v1766
        %v1768 = vcombine.low %v1760, %v1767
        %1770 = vst [vmem:[%s337] sm:$0xff] %v1768
        %s1771 = sand.u32 %s149, 1
        %s1772 = scalar_lea.sflag [#allocation4], %s1771
        %s1773 = sand.u32 %s149, 1
        %s1774 = smul.addr %s1773, 8
        %s1775 = scalar_lea.vmem [#allocation10], %s1774
        // Predicated region
        $region61: #{tpu_custom_call.1} parent=39 // pred_check
          %p1776 = pneg %p159
        $region62: #{tpu_custom_call.1} parent=39 // pred_check_branch
          %1778 = sbr.rel (%p1776) target = $region64
        $region63: #{tpu_custom_call.1} parent=39 // pred_region
          %s1780 = ssub.s32 128, 128
          %1781 = vsyncadd %s1772, %s1780
          %s1782 = smul.addr %s21, 8
          %s1783 = smul.addr %s1782, 16
          %s1784 = scalar_lea.hbm %s5, %s1783
          %s1786 = sshll.u32 %s1775, 4
          %s1787 = int_to_ptr.vmem [resolvable:$true] %s1786
          %1789 = dma.vmem_to_hbm [thread:$0]  %s1787, 128, %s1784, %s1772
        $region64: #{tpu_custom_call.1} parent=39 // pred_fallthru
          _
      $region40: #{tpu_custom_call.1} parent=5 // pred_fallthru
        _
      %p1790 = scmp.le.s32.totalorder 2, %s16
      // Predicated region
      $region65: #{tpu_custom_call.1} parent=5 // pred_check
        %p1791 = pneg %p1790
      $region66: #{tpu_custom_call.1} parent=5 // pred_check_branch
        %1793 = sbr.rel (%p1791) target = $region68
      $region67: #{tpu_custom_call.1} parent=5 // pred_region
        %s1794 = ssub.s32 %s16, 2
        // Predicated region
        $region69: #{tpu_custom_call.1} parent=67 // pred_check
          %p1795 = pneg %p165
        $region70: #{tpu_custom_call.1} parent=67 // pred_check_branch
          %1797 = sbr.rel (%p1795) target = $region72
        $region71: #{tpu_custom_call.1} parent=67 // pred_region
          %s1798 = sand.u32 %s150, 1
          %s1799 = scalar_lea.sflag [#allocation4], %s1798
          %s1800 = sand.u32 %s150, 1
          %s1801 = smul.addr %s1800, 8
          %s1802 = scalar_lea.vmem [#allocation10], %s1801
          %1803 = dma.done %s1799, 128
        $region72: #{tpu_custom_call.1} parent=67 // pred_fallthru
          _
      $region68: #{tpu_custom_call.1} parent=5 // pred_fallthru
        _
    $region6: #{tpu_custom_call.1} parent=1 // loop_footer
      %s20 = sadd.s32 1, %s16
    $region7: #{tpu_custom_call.1} parent=1 // loop_footer_branch
      %15 = sbr.rel target = $region3
    $region8: #{tpu_custom_call.1} parent=1 // loop_exit
      _
    %1804 = vsyncpa [#allocation3], 1
    %s1805 = scalar_lea.sflag [#allocation3], 1
    %1806 = vsyncpa %s1805, 1
    %1807 = vsyncpa [#allocation6], 1
    %1808 = vsyncpa [#allocation4], 1
    %s1809 = scalar_lea.sflag [#allocation4], 1
    %1810 = vsyncpa %s1809, 1

</llo_original>
